<compile_context>
chip_gen: v7x
topology: tpu7x:2x2x1
jax: 0.10.0
libtpu: 0.0.40
codegen_flags: <defaults>
</compile_context>

<pallas_src>
import math

import jax
import jax.numpy as jnp
from jax.experimental import pallas as pl
from jax.experimental.pallas import tpu as pltpu


# Finite masking sentinel. Must be a Python float: a jnp scalar here is traced
# as a captured constant and rejected by pallas_call.
_NEG_BIG = -1e30


def _qkv_proj_kernel(x_ref, w_ref, b_ref, qkv_ref):
    # One row tile per grid step: fused (tp, E) @ (E, 3H) on the MXU with f32
    # accumulation, bias added in f32, bf16 writeback.
    acc = jnp.dot(x_ref[...], w_ref[...], preferred_element_type=jnp.float32)
    qkv_ref[...] = (acc + b_ref[...]).astype(qkv_ref.dtype)


def _flash_attn_kernel(q_ref, k_ref, v_ref, mask_ref, o_ref,
                       m_scr, l_scr, acc_scr):
    kv = pl.program_id(2)

    @pl.when(kv == 0)
    def _init():
        m_scr[...] = jnp.full_like(m_scr, _NEG_BIG)
        l_scr[...] = jnp.zeros_like(l_scr)
        acc_scr[...] = jnp.zeros_like(acc_scr)

    q = q_ref[0]                                 # (TQ, H) bf16, pre-scaled by 1/sqrt(H)
    k = k_ref[0]                                 # (TK, H) bf16
    v = v_ref[0]                                 # (TK, H) bf16
    unmasked = mask_ref[0] != 0                  # (TQ, TK) bool, 0 = masked out

    # q @ k^T, contracting the head dims directly (Mosaic drives the MXU with
    # the NT form natively; no materialized transpose of K).
    s = jax.lax.dot_general(q, k, (((1,), (1,)), ((), ())),
                            preferred_element_type=jnp.float32)
    s = jnp.where(unmasked, s, _NEG_BIG)

    # TODO(synk): dropout on pre-softmax logits is eval-mode identity here;
    # training-mode dropout would need pltpu.prng_seed/prng_random_bits.

    # Online (flash) softmax update across kv tiles.
    m_prev = m_scr[...]
    m_new = jnp.maximum(m_prev, jnp.max(s, axis=-1, keepdims=True))
    alpha = jnp.exp(m_prev - m_new)
    # Explicitly zero masked probabilities: fully-masked kv blocks contribute
    # nothing regardless of sentinel / underflow behaviour.
    p = jnp.where(unmasked, jnp.exp(s - m_new), 0.0)
    l_scr[...] = alpha * l_scr[...] + jnp.sum(p, axis=-1, keepdims=True)
    acc_scr[...] = alpha * acc_scr[...] + jnp.dot(
        p.astype(jnp.bfloat16), v, preferred_element_type=jnp.float32)
    m_scr[...] = m_new

    @pl.when(kv == pl.num_programs(2) - 1)
    def _finalize():
        inv_l = pl.reciprocal(l_scr[...], approx=True)      # EUP slot, ~free
        o_ref[0] = (acc_scr[...] * inv_l).astype(o_ref.dtype)


def self_attention(x, wq, wk, wv, bq, bk, bv, mask, *, hidden_dim,
                   tq=256, tk=512, tp=1024):
    """Q/K/V projections + masked softmax attention. mask: 0 = masked out.

    Tile sizes (runtime-tunable, clamped to the problem size):
      tp    row tile of the fused QKV projection over the flattened B*S axis.
      tq/tk query / key tiles of the attention kernel.  tk >= 256 fills the
            256-wide MXU on v6e/v7x (128 is already optimal on v5e).
    At H = 128 the default tiles use ~1.5 MiB of double-buffered VMEM, well
    below every generation's scoped limit; set vmem_limit_bytes explicitly via
    CompilerParams only when sweeping much larger tiles.
    """
    B, S, E = x.shape
    H = hidden_dim
    assert H % 128 == 0, "hidden_dim must be a multiple of 128 (lane-dense QKV slab)"

    tq = min(tq, S)
    tk = min(tk, S)
    assert S % tq == 0 and S % tk == 0, "S must be divisible by tq and tk"

    M = B * S
    tp = min(tp, M)
    assert M % tp == 0, "B*S must be divisible by tp"

    scale = 1.0 / math.sqrt(H)

    # Fold the 1/sqrt(H) softmax scale into the query projection: free on the
    # host, removes a (tq, tk) f32 multiply from every kv step.
    w_fused = jnp.concatenate([wq * scale, wk, wv], axis=1).astype(jnp.bfloat16)
    b_fused = jnp.concatenate([bq * scale, bk, bv], axis=1).astype(jnp.float32)

    xb = x.reshape(M, E).astype(jnp.bfloat16)
    mask_i8 = mask.astype(jnp.int8)                          # 4x less mask DMA

    # ---- kernel 1: fused QKV projection, grid (M // tp,) ----
    qkv = pl.pallas_call(
        _qkv_proj_kernel,
        out_shape=jax.ShapeDtypeStruct((M, 3 * H), jnp.bfloat16),
        grid_spec=pltpu.PrefetchScalarGridSpec(
            num_scalar_prefetch=0,
            grid=(M // tp,),
            in_specs=[
                pl.BlockSpec((tp, E), lambda i: (i, 0)),      # X row tile
                pl.BlockSpec((E, 3 * H), lambda i: (0, 0)),   # fused Wq|Wk|Wv
                pl.BlockSpec((1, 3 * H), lambda i: (0, 0)),   # fused bias
            ],
            out_specs=pl.BlockSpec((tp, 3 * H), lambda i: (i, 0)),
        ),
        compiler_params=pltpu.CompilerParams(
            dimension_semantics=("parallel",)),
    )(xb, w_fused, b_fused)

    qkv = qkv.reshape(B, S, 3 * H)

    # ---- kernel 2: flash attention, grid (B, S // tq, S // tk) ----
    # Q/K/V are column blocks 0/1/2 of the fused (B, S, 3H) slab; the slab is
    # passed three times with different index_maps (one DMA stream each).
    out = pl.pallas_call(
        _flash_attn_kernel,
        out_shape=jax.ShapeDtypeStruct((B, S, H), x.dtype),
        grid_spec=pltpu.PrefetchScalarGridSpec(
            num_scalar_prefetch=0,
            grid=(B, S // tq, S // tk),
            in_specs=[
                pl.BlockSpec((1, tq, H), lambda b, qi, ki: (b, qi, 0)),   # Q
                pl.BlockSpec((1, tk, H), lambda b, qi, ki: (b, ki, 1)),   # K
                pl.BlockSpec((1, tk, H), lambda b, qi, ki: (b, ki, 2)),   # V
                pl.BlockSpec((1, tq, tk), lambda b, qi, ki: (b, qi, ki)), # mask
            ],
            out_specs=pl.BlockSpec((1, tq, H), lambda b, qi, ki: (b, qi, 0)),
            scratch_shapes=[
                pltpu.VMEM((tq, 1), jnp.float32),   # running max
                pltpu.VMEM((tq, 1), jnp.float32),   # running denom
                pltpu.VMEM((tq, H), jnp.float32),   # output accumulator
            ],
        ),
        compiler_params=pltpu.CompilerParams(
            dimension_semantics=("parallel", "parallel", "arbitrary")),
    )(qkv, qkv, qkv, mask_i8)
    return out


def reference(x, wq, wk, wv, bq, bk, bv, mask, hidden_dim):
    q = x @ wq + bq
    k = x @ wk + bk
    v = x @ wv + bv
    s = jnp.einsum("bqh,bkh->bqk", q, k) / math.sqrt(hidden_dim)
    s = jnp.where(mask == 0, -jnp.inf, s)
    p = jax.nn.softmax(s, axis=-1)
    return jnp.einsum("bqk,bkh->bqh", p, v)


if __name__ == "__main__":
    # Lane-dense small shapes: E = H = 128 fills 128-lane vregs; S = 256 keeps
    # the test fast while exercising both kernels (tiles clamp to S here).
    B, S, E, H = 2, 256, 128, 128

    key = jax.random.PRNGKey(0)
    kx, kq, kk, kv, kbq, kbk, kbv = jax.random.split(key, 7)

    # Deterministic init matching nn.Linear's U(-1/sqrt(E), 1/sqrt(E)).
    bound = 1.0 / math.sqrt(E)
    x = jax.random.normal(kx, (B, S, E), dtype=jnp.float32)
    wq = jax.random.uniform(kq, (E, H), jnp.float32, -bound, bound)
    wk = jax.random.uniform(kk, (E, H), jnp.float32, -bound, bound)
    wv = jax.random.uniform(kv, (E, H), jnp.float32, -bound, bound)
    bq = jax.random.uniform(kbq, (1, H), jnp.float32, -bound, bound)
    bk = jax.random.uniform(kbk, (1, H), jnp.float32, -bound, bound)
    bv = jax.random.uniform(kbv, (1, H), jnp.float32, -bound, bound)

    # Causal attention mask (no fully-masked rows), 0 = masked out.
    causal = jnp.tril(jnp.ones((S, S), dtype=jnp.int8))
    mask = jnp.broadcast_to(causal, (B, S, S))

    out = self_attention(x, wq, wk, wv, bq, bk, bv, mask, hidden_dim=H)
    out = jax.block_until_ready(out)

    ref = reference(x, wq, wk, wv, bq, bk, bv, mask, H)
    assert out.shape == (B, S, H)
    # bf16 MXU operands + approximate reciprocal vs an f32 reference.
    max_err = jnp.max(jnp.abs(out - ref))
    assert jnp.allclose(out, ref, atol=5e-2, rtol=5e-2), f"mismatch: {max_err}"

    print("KERNEL_OK")
</pallas_src>

<mosaic_0001>
module attributes {stable_mosaic.version = 11 : i64} {
  func.func @_qkv_proj_kernel(%arg0: i32, %arg1: memref<512x128xbf16, #tpu.memory_space<vmem>>, %arg2: memref<128x384xbf16, #tpu.memory_space<vmem>>, %arg3: memref<1x384xf32, #tpu.memory_space<vmem>>, %arg4: memref<512x384xbf16, #tpu.memory_space<vmem>>) attributes {dimension_semantics = [#tpu.dimension_semantics<parallel>], iteration_bounds = array<i64: 1>, scalar_prefetch = 0 : i64, scratch_operands = 0 : i64, tpu.core_type = #tpu.core_type<tc>, window_params = [{transform_indices = @transform_0, window_bounds = array<i64: 512, 128>}, {pipeline_mode = #tpu.pipeline_mode<synchronous>, transform_indices = @transform_1, window_bounds = array<i64: 128, 384>}, {pipeline_mode = #tpu.pipeline_mode<synchronous>, transform_indices = @transform_2, window_bounds = array<i64: 1, 384>}, {transform_indices = @transform_3, window_bounds = array<i64: 512, 384>}]} {
    %c0 = arith.constant 0 : index
    %c0_0 = arith.constant 0 : index
    %0 = vector.load %arg1[%c0, %c0_0] : memref<512x128xbf16, #tpu.memory_space<vmem>>, vector<512x128xbf16>
    %c0_1 = arith.constant 0 : index
    %c0_2 = arith.constant 0 : index
    %1 = vector.load %arg2[%c0_1, %c0_2] : memref<128x384xbf16, #tpu.memory_space<vmem>>, vector<128x384xbf16>
    %cst = arith.constant dense<0.000000e+00> : vector<512x384xf32>
    %2 = tpu.matmul %0, %1, %cst {dimension_numbers = #tpu.dot_dimension_numbers<[1], [0], [0], [1], [0, 0, 1, 1], [], []>} : vector<512x128xbf16>, vector<128x384xbf16>, vector<512x384xf32> -> vector<512x384xf32>
    %c0_3 = arith.constant 0 : index
    %c0_4 = arith.constant 0 : index
    %3 = vector.load %arg3[%c0_3, %c0_4] : memref<1x384xf32, #tpu.memory_space<vmem>>, vector<1x384xf32>
    %4 = vector.broadcast %3 : vector<1x384xf32> to vector<512x384xf32>
    %5 = arith.addf %2, %4 : vector<512x384xf32>
    %6 = arith.truncf %5 : vector<512x384xf32> to vector<512x384xbf16>
    %c0_5 = arith.constant 0 : index
    %c0_6 = arith.constant 0 : index
    %7 = vector.load %arg4[%c0_5, %c0_6] : memref<512x384xbf16, #tpu.memory_space<vmem>>, vector<512x384xbf16>
    tpu.vector_store %arg4[%c0_5, %c0_6], %6 {strides = array<i32>} : memref<512x384xbf16, #tpu.memory_space<vmem>>, vector<512x384xbf16>,
    return
  }
  func.func @transform_0(%arg0: i32) -> (i32, i32) {
    %c0_i32 = arith.constant 0 : i32
    %c0_i32_0 = arith.constant 0 : i32
    return %arg0, %c0_i32 : i32, i32
  }
  func.func @transform_1(%arg0: i32) -> (i32, i32) {
    %c0_i32 = arith.constant 0 : i32
    %c0_i32_0 = arith.constant 0 : i32
    %c0_i32_1 = arith.constant 0 : i32
    return %c0_i32, %c0_i32_0 : i32, i32
  }
  func.func @transform_2(%arg0: i32) -> (i32, i32) {
    %c0_i32 = arith.constant 0 : i32
    %c0_i32_0 = arith.constant 0 : i32
    %c0_i32_1 = arith.constant 0 : i32
    return %c0_i32, %c0_i32_0 : i32, i32
  }
  func.func @transform_3(%arg0: i32) -> (i32, i32) {
    %c0_i32 = arith.constant 0 : i32
    %c0_i32_0 = arith.constant 0 : i32
    return %arg0, %c0_i32 : i32, i32
  }
}

</mosaic_0001>

<llo_original>
// kernel: tpu_custom_call.1
$region0: #{tpu_custom_call.1}
  #allocation0 [shape = 'u32[]', space=smem, size = 0x4, offset = 0x4, fixed_abs, tag = 'smem constant byte address 0x4 - core index']
  #allocation1 [shape = 'u32[144,128]{1,0:T(1,128)}', space=vmem, size = 0x12000, scoped, tag = 'internal scratch']
  %s0 = inlined_call_operand.hbm [shape: bf16[512,128], index: 0, kind: input, shape index: {}]
  %s1 = inlined_call_operand.hbm [shape: bf16[128,384], index: 1, kind: input, shape index: {}]
  %s2 = inlined_call_operand.vmem [shape: f32[1,384], index: 2, kind: input, shape index: {}]
  %s3 = inlined_call_operand.hbm [shape: bf16[512,384], index: 3, kind: output, shape index: {}]
  %s4 = sld [smem:[#allocation0]]
  $region30: #{tpu_custom_call.1} parent=0
    _
  %s6 = ssub.s32 1, %s4
  %s7 = scalar_select 0, %s6, %s4
  $region1: #{tpu_custom_call.1} parent=0
    #allocation2 [shape = 'u8[131072]{0}', space=vmem, size = 0x20000, scoped, tag = 'input window, operand 0, single buffered']
    #allocation3 [shape = 's32[1]{0}', space=sflag, size = 0x4, scoped, tag = 'scoped memory for tpu_custom_call.1']
    #allocation4 [shape = 's32[1]{0}', space=sflag, size = 0x4, scoped, tag = 'scoped memory for tpu_custom_call.1']
    #allocation5 [shape = 'u8[98304]{0}', space=vmem, size = 0x18000, scoped, tag = 'input window, operand 1, single buffered']
    #allocation6 [shape = 's32[1]{0}', space=sflag, size = 0x4, scoped, tag = 'scoped memory for tpu_custom_call.1']
    #allocation7 [shape = 'u8[393216]{0}', space=vmem, size = 0x60000, scoped, tag = 'output window, operand 0, single buffered']
    %8 = vsyncpa [#allocation3], 0
    %9 = vsyncpa [#allocation6], 0
    %10 = vsyncpa [#allocation4], 0
    // Predicated region
    $region2: #{tpu_custom_call.1} parent=1 // pred_check
      _
    $region3: #{tpu_custom_call.1} parent=1 // pred_check_branch
      %12 = sbr.rel (0) target = $region5
    $region4: #{tpu_custom_call.1} parent=1 // pred_region
      %s14 = ssub.s32 4096, 4096
      %15 = vsyncadd [#allocation3], %s14
      %s16 = sshll.u32 [#allocation2], 4
      %s17 = int_to_ptr.vmem [resolvable:$true] %s16
      %22 = dma.hbm_to_vmem [thread:$0]  %s0, 4096, %s17, [#allocation3], 64, 64, 4
    $region5: #{tpu_custom_call.1} parent=1 // pred_fallthru
      _
    // Predicated region
    $region6: #{tpu_custom_call.1} parent=1 // pred_check
      _
    $region7: #{tpu_custom_call.1} parent=1 // pred_check_branch
      %24 = sbr.rel (0) target = $region9
    $region8: #{tpu_custom_call.1} parent=1 // pred_region
      %s26 = ssub.s32 3072, 3072
      %27 = vsyncadd [#allocation6], %s26
      %s28 = sshll.u32 [#allocation5], 4
      %s29 = int_to_ptr.vmem [resolvable:$true] %s28
      %34 = dma.hbm_to_vmem [thread:$0]  %s1, 3072, %s29, [#allocation6], 192, 192, 12
    $region9: #{tpu_custom_call.1} parent=1 // pred_fallthru
      _
    // Predicated region
    $region10: #{tpu_custom_call.1} parent=1 // pred_check
      _
    $region11: #{tpu_custom_call.1} parent=1 // pred_check_branch
      %36 = sbr.rel (0) target = $region13
    $region12: #{tpu_custom_call.1} parent=1 // pred_region
      _
    $region13: #{tpu_custom_call.1} parent=1 // pred_fallthru
      _
    // Predicated region
    $region14: #{tpu_custom_call.1} parent=1 // pred_check
      _
    $region15: #{tpu_custom_call.1} parent=1 // pred_check_branch
      %38 = sbr.rel (0) target = $region17
    $region16: #{tpu_custom_call.1} parent=1 // pred_region
      %39 = dma.done [#allocation3], 4096
    $region17: #{tpu_custom_call.1} parent=1 // pred_fallthru
      _
    // Predicated region
    $region18: #{tpu_custom_call.1} parent=1 // pred_check
      _
    $region19: #{tpu_custom_call.1} parent=1 // pred_check_branch
      %41 = sbr.rel (0) target = $region21
    $region20: #{tpu_custom_call.1} parent=1 // pred_region
      %42 = dma.done [#allocation6], 3072
    $region21: #{tpu_custom_call.1} parent=1 // pred_fallthru
      _
    %v44 = vld [vmem:[#allocation2] sm:$0xf]
    %v45 = vld [vmem:[#allocation2 + $0x4] sm:$0xf]
    %v46 = vld [vmem:[#allocation2 + $0x8] sm:$0xf]
    %v47 = vld [vmem:[#allocation2 + $0xc] sm:$0xf]
    %v48 = vld [vmem:[#allocation2 + $0x10] sm:$0xf]
    %v49 = vld [vmem:[#allocation2 + $0x14] sm:$0xf]
    %v50 = vld [vmem:[#allocation2 + $0x18] sm:$0xf]
    %v51 = vld [vmem:[#allocation2 + $0x1c] sm:$0xf]
    %v52 = vld [vmem:[#allocation2 + $0x20] sm:$0xf]
    %v53 = vld [vmem:[#allocation2 + $0x24] sm:$0xf]
    %v54 = vld [vmem:[#allocation2 + $0x28] sm:$0xf]
    %v55 = vld [vmem:[#allocation2 + $0x2c] sm:$0xf]
    %v56 = vld [vmem:[#allocation2 + $0x30] sm:$0xf]
    %v57 = vld [vmem:[#allocation2 + $0x34] sm:$0xf]
    %v58 = vld [vmem:[#allocation2 + $0x38] sm:$0xf]
    %v59 = vld [vmem:[#allocation2 + $0x3c] sm:$0xf]
    %v60 = vld [vmem:[#allocation2 + $0x40] sm:$0xf]
    %v61 = vld [vmem:[#allocation2 + $0x44] sm:$0xf]
    %v62 = vld [vmem:[#allocation2 + $0x48] sm:$0xf]
    %v63 = vld [vmem:[#allocation2 + $0x4c] sm:$0xf]
    %v64 = vld [vmem:[#allocation2 + $0x50] sm:$0xf]
    %v65 = vld [vmem:[#allocation2 + $0x54] sm:$0xf]
    %v66 = vld [vmem:[#allocation2 + $0x58] sm:$0xf]
    %v67 = vld [vmem:[#allocation2 + $0x5c] sm:$0xf]
    %v68 = vld [vmem:[#allocation2 + $0x60] sm:$0xf]
    %v69 = vld [vmem:[#allocation2 + $0x64] sm:$0xf]
    %v70 = vld [vmem:[#allocation2 + $0x68] sm:$0xf]
    %v71 = vld [vmem:[#allocation2 + $0x6c] sm:$0xf]
    %v72 = vld [vmem:[#allocation2 + $0x70] sm:$0xf]
    %v73 = vld [vmem:[#allocation2 + $0x74] sm:$0xf]
    %v74 = vld [vmem:[#allocation2 + $0x78] sm:$0xf]
    %v75 = vld [vmem:[#allocation2 + $0x7c] sm:$0xf]
    %v76 = vld [vmem:[#allocation2 + $0x80] sm:$0xf]
    %v77 = vld [vmem:[#allocation2 + $0x84] sm:$0xf]
    %v78 = vld [vmem:[#allocation2 + $0x88] sm:$0xf]
    %v79 = vld [vmem:[#allocation2 + $0x8c] sm:$0xf]
    %v80 = vld [vmem:[#allocation2 + $0x90] sm:$0xf]
    %v81 = vld [vmem:[#allocation2 + $0x94] sm:$0xf]
    %v82 = vld [vmem:[#allocation2 + $0x98] sm:$0xf]
    %v83 = vld [vmem:[#allocation2 + $0x9c] sm:$0xf]
    %v84 = vld [vmem:[#allocation2 + $0xa0] sm:$0xf]
    %v85 = vld [vmem:[#allocation2 + $0xa4] sm:$0xf]
    %v86 = vld [vmem:[#allocation2 + $0xa8] sm:$0xf]
    %v87 = vld [vmem:[#allocation2 + $0xac] sm:$0xf]
    %v88 = vld [vmem:[#allocation2 + $0xb0] sm:$0xf]
    %v89 = vld [vmem:[#allocation2 + $0xb4] sm:$0xf]
    %v90 = vld [vmem:[#allocation2 + $0xb8] sm:$0xf]
    %v91 = vld [vmem:[#allocation2 + $0xbc] sm:$0xf]
    %v92 = vld [vmem:[#allocation2 + $0xc0] sm:$0xf]
    %v93 = vld [vmem:[#allocation2 + $0xc4] sm:$0xf]
    %v94 = vld [vmem:[#allocation2 + $0xc8] sm:$0xf]
    %v95 = vld [vmem:[#allocation2 + $0xcc] sm:$0xf]
    %v96 = vld [vmem:[#allocation2 + $0xd0] sm:$0xf]
    %v97 = vld [vmem:[#allocation2 + $0xd4] sm:$0xf]
    %v98 = vld [vmem:[#allocation2 + $0xd8] sm:$0xf]
    %v99 = vld [vmem:[#allocation2 + $0xdc] sm:$0xf]
    %v100 = vld [vmem:[#allocation2 + $0xe0] sm:$0xf]
    %v101 = vld [vmem:[#allocation2 + $0xe4] sm:$0xf]
    %v102 = vld [vmem:[#allocation2 + $0xe8] sm:$0xf]
    %v103 = vld [vmem:[#allocation2 + $0xec] sm:$0xf]
    %v104 = vld [vmem:[#allocation2 + $0xf0] sm:$0xf]
    %v105 = vld [vmem:[#allocation2 + $0xf4] sm:$0xf]
    %v106 = vld [vmem:[#allocation2 + $0xf8] sm:$0xf]
    %v107 = vld [vmem:[#allocation2 + $0xfc] sm:$0xf]
    %v108 = vld [vmem:[#allocation5] sm:$0xff]
    %v109 = vld [vmem:[#allocation5 + $0x8] sm:$0xf]
    %v110 = vld [vmem:[#allocation5 + $0xc] sm:$0xff]
    %v111 = vld [vmem:[#allocation5 + $0x14] sm:$0xf]
    %v112 = vld [vmem:[#allocation5 + $0x18] sm:$0xff]
    %v113 = vld [vmem:[#allocation5 + $0x20] sm:$0xf]
    %v114 = vld [vmem:[#allocation5 + $0x24] sm:$0xff]
    %v115 = vld [vmem:[#allocation5 + $0x2c] sm:$0xf]
    %v116 = vld [vmem:[#allocation5 + $0x30] sm:$0xff]
    %v117 = vld [vmem:[#allocation5 + $0x38] sm:$0xf]
    %v118 = vld [vmem:[#allocation5 + $0x3c] sm:$0xff]
    %v119 = vld [vmem:[#allocation5 + $0x44] sm:$0xf]
    %v120 = vld [vmem:[#allocation5 + $0x48] sm:$0xff]
    %v121 = vld [vmem:[#allocation5 + $0x50] sm:$0xf]
    %v122 = vld [vmem:[#allocation5 + $0x54] sm:$0xff]
    %v123 = vld [vmem:[#allocation5 + $0x5c] sm:$0xf]
    %v124 = vld [vmem:[#allocation5 + $0x60] sm:$0xff]
    %v125 = vld [vmem:[#allocation5 + $0x68] sm:$0xf]
    %v126 = vld [vmem:[#allocation5 + $0x6c] sm:$0xff]
    %v127 = vld [vmem:[#allocation5 + $0x74] sm:$0xf]
    %v128 = vld [vmem:[#allocation5 + $0x78] sm:$0xff]
    %v129 = vld [vmem:[#allocation5 + $0x80] sm:$0xf]
    %v130 = vld [vmem:[#allocation5 + $0x84] sm:$0xff]
    %v131 = vld [vmem:[#allocation5 + $0x8c] sm:$0xf]
    %v132 = vld [vmem:[#allocation5 + $0x90] sm:$0xff]
    %v133 = vld [vmem:[#allocation5 + $0x98] sm:$0xf]
    %v134 = vld [vmem:[#allocation5 + $0x9c] sm:$0xff]
    %v135 = vld [vmem:[#allocation5 + $0xa4] sm:$0xf]
    %v136 = vld [vmem:[#allocation5 + $0xa8] sm:$0xff]
    %v137 = vld [vmem:[#allocation5 + $0xb0] sm:$0xf]
    %v138 = vld [vmem:[#allocation5 + $0xb4] sm:$0xff]
    %v139 = vld [vmem:[#allocation5 + $0xbc] sm:$0xf]
    %v140 = vld [vmem:[%s2] sm:$0x7]
    %v142 = vlaneseq
    %v143 = vshrl.u32 %v142, 7
    %v144 = vsub.s32 0, %v143
    %v145 = vrot.slane %v140, %v144
    %v146 = vlaneseq
    %v147 = vshrl.u32 %v146, 7
    %v148 = vsub.s32 1, %v147
    %v149 = vrot.slane %v140, %v148
    %v150 = vlaneseq
    %v151 = vshrl.u32 %v150, 7
    %v152 = vsub.s32 2, %v151
    %v153 = vrot.slane %v140, %v152
    %v221 = vunpack.c.l.b16 %v44
    %v222 = vunpack.c.l.b16 %v45
    %v223 = vunpack.c.l.b16 %v46
    %v224 = vunpack.c.l.b16 %v47
    %v225 = vunpack.c.l.b16 %v48
    %v226 = vunpack.c.l.b16 %v49
    %v227 = vunpack.c.l.b16 %v50
    %v228 = vunpack.c.l.b16 %v51
    %v229 = vunpack.c.l.b16 %v52
    %v230 = vunpack.c.l.b16 %v53
    %v231 = vunpack.c.l.b16 %v54
    %v232 = vunpack.c.l.b16 %v55
    %v233 = vunpack.c.l.b16 %v56
    %v234 = vunpack.c.l.b16 %v57
    %v235 = vunpack.c.l.b16 %v58
    %v236 = vunpack.c.l.b16 %v59
    %v237 = vunpack.c.l.b16 %v60
    %v238 = vunpack.c.l.b16 %v61
    %v239 = vunpack.c.l.b16 %v62
    %v240 = vunpack.c.l.b16 %v63
    %v241 = vunpack.c.l.b16 %v64
    %v242 = vunpack.c.l.b16 %v65
    %v243 = vunpack.c.l.b16 %v66
    %v244 = vunpack.c.l.b16 %v67
    %v245 = vunpack.c.l.b16 %v68
    %v246 = vunpack.c.l.b16 %v69
    %v247 = vunpack.c.l.b16 %v70
    %v248 = vunpack.c.l.b16 %v71
    %v249 = vunpack.c.l.b16 %v72
    %v250 = vunpack.c.l.b16 %v73
    %v251 = vunpack.c.l.b16 %v74
    %v252 = vunpack.c.l.b16 %v75
    %v253 = vunpack.c.l.b16 %v76
    %v254 = vunpack.c.l.b16 %v77
    %v255 = vunpack.c.l.b16 %v78
    %v256 = vunpack.c.l.b16 %v79
    %v257 = vunpack.c.l.b16 %v80
    %v258 = vunpack.c.l.b16 %v81
    %v259 = vunpack.c.l.b16 %v82
    %v260 = vunpack.c.l.b16 %v83
    %v261 = vunpack.c.l.b16 %v84
    %v262 = vunpack.c.l.b16 %v85
    %v263 = vunpack.c.l.b16 %v86
    %v264 = vunpack.c.l.b16 %v87
    %v265 = vunpack.c.l.b16 %v88
    %v266 = vunpack.c.l.b16 %v89
    %v267 = vunpack.c.l.b16 %v90
    %v268 = vunpack.c.l.b16 %v91
    %v269 = vunpack.c.l.b16 %v92
    %v270 = vunpack.c.l.b16 %v93
    %v271 = vunpack.c.l.b16 %v94
    %v272 = vunpack.c.l.b16 %v95
    %v273 = vunpack.c.l.b16 %v96
    %v274 = vunpack.c.l.b16 %v97
    %v275 = vunpack.c.l.b16 %v98
    %v276 = vunpack.c.l.b16 %v99
    %v277 = vunpack.c.l.b16 %v100
    %v278 = vunpack.c.l.b16 %v101
    %v279 = vunpack.c.l.b16 %v102
    %v280 = vunpack.c.l.b16 %v103
    %v281 = vunpack.c.l.b16 %v104
    %v282 = vunpack.c.l.b16 %v105
    %v283 = vunpack.c.l.b16 %v106
    %v284 = vunpack.c.l.b16 %v107
    %v285 = vpack.c.b16 %v222, %v221
    %v286 = vpack.c.b16 %v224, %v223
    %v287 = vpack.c.b16 %v226, %v225
    %v288 = vpack.c.b16 %v228, %v227
    %v289 = vpack.c.b16 %v230, %v229
    %v290 = vpack.c.b16 %v232, %v231
    %v291 = vpack.c.b16 %v234, %v233
    %v292 = vpack.c.b16 %v236, %v235
    %v293 = vpack.c.b16 %v238, %v237
    %v294 = vpack.c.b16 %v240, %v239
    %v295 = vpack.c.b16 %v242, %v241
    %v296 = vpack.c.b16 %v244, %v243
    %v297 = vpack.c.b16 %v246, %v245
    %v298 = vpack.c.b16 %v248, %v247
    %v299 = vpack.c.b16 %v250, %v249
    %v300 = vpack.c.b16 %v252, %v251
    %v301 = vpack.c.b16 %v254, %v253
    %v302 = vpack.c.b16 %v256, %v255
    %v303 = vpack.c.b16 %v258, %v257
    %v304 = vpack.c.b16 %v260, %v259
    %v305 = vpack.c.b16 %v262, %v261
    %v306 = vpack.c.b16 %v264, %v263
    %v307 = vpack.c.b16 %v266, %v265
    %v308 = vpack.c.b16 %v268, %v267
    %v309 = vpack.c.b16 %v270, %v269
    %v310 = vpack.c.b16 %v272, %v271
    %v311 = vpack.c.b16 %v274, %v273
    %v312 = vpack.c.b16 %v276, %v275
    %v313 = vpack.c.b16 %v278, %v277
    %v314 = vpack.c.b16 %v280, %v279
    %v315 = vpack.c.b16 %v282, %v281
    %v316 = vpack.c.b16 %v284, %v283
    %v381 = vunpack.c.l.b16 %v108
    %v382 = vunpack.c.h.b16 %v108
    %v383 = vunpack.c.l.b16 %v109
    %v384 = vunpack.c.l.b16 %v110
    %v385 = vunpack.c.h.b16 %v110
    %v386 = vunpack.c.l.b16 %v111
    %v387 = vunpack.c.l.b16 %v112
    %v388 = vunpack.c.h.b16 %v112
    %v389 = vunpack.c.l.b16 %v113
    %v390 = vunpack.c.l.b16 %v114
    %v391 = vunpack.c.h.b16 %v114
    %v392 = vunpack.c.l.b16 %v115
    %v393 = vunpack.c.l.b16 %v116
    %v394 = vunpack.c.h.b16 %v116
    %v395 = vunpack.c.l.b16 %v117
    %v396 = vunpack.c.l.b16 %v118
    %v397 = vunpack.c.h.b16 %v118
    %v398 = vunpack.c.l.b16 %v119
    %v399 = vunpack.c.l.b16 %v120
    %v400 = vunpack.c.h.b16 %v120
    %v401 = vunpack.c.l.b16 %v121
    %v402 = vunpack.c.l.b16 %v122
    %v403 = vunpack.c.h.b16 %v122
    %v404 = vunpack.c.l.b16 %v123
    %v405 = vunpack.c.l.b16 %v124
    %v406 = vunpack.c.h.b16 %v124
    %v407 = vunpack.c.l.b16 %v125
    %v408 = vunpack.c.l.b16 %v126
    %v409 = vunpack.c.h.b16 %v126
    %v410 = vunpack.c.l.b16 %v127
    %v411 = vunpack.c.l.b16 %v128
    %v412 = vunpack.c.h.b16 %v128
    %v413 = vunpack.c.l.b16 %v129
    %v414 = vunpack.c.l.b16 %v130
    %v415 = vunpack.c.h.b16 %v130
    %v416 = vunpack.c.l.b16 %v131
    %v417 = vunpack.c.l.b16 %v132
    %v418 = vunpack.c.h.b16 %v132
    %v419 = vunpack.c.l.b16 %v133
    %v420 = vunpack.c.l.b16 %v134
    %v421 = vunpack.c.h.b16 %v134
    %v422 = vunpack.c.l.b16 %v135
    %v423 = vunpack.c.l.b16 %v136
    %v424 = vunpack.c.h.b16 %v136
    %v425 = vunpack.c.l.b16 %v137
    %v426 = vunpack.c.l.b16 %v138
    %v427 = vunpack.c.h.b16 %v138
    %v428 = vunpack.c.l.b16 %v139
    %v429 = vpack.c.b16 %v384, %v381
    %v430 = vpack.c.b16 %v385, %v382
    %v431 = vpack.c.b16 %v386, %v383
    %v432 = vpack.c.b16 %v390, %v387
    %v433 = vpack.c.b16 %v391, %v388
    %v434 = vpack.c.b16 %v392, %v389
    %v435 = vpack.c.b16 %v396, %v393
    %v436 = vpack.c.b16 %v397, %v394
    %v437 = vpack.c.b16 %v398, %v395
    %v438 = vpack.c.b16 %v402, %v399
    %v439 = vpack.c.b16 %v403, %v400
    %v440 = vpack.c.b16 %v404, %v401
    %v441 = vpack.c.b16 %v408, %v405
    %v442 = vpack.c.b16 %v409, %v406
    %v443 = vpack.c.b16 %v410, %v407
    %v444 = vpack.c.b16 %v414, %v411
    %v445 = vpack.c.b16 %v415, %v412
    %v446 = vpack.c.b16 %v416, %v413
    %v447 = vpack.c.b16 %v420, %v417
    %v448 = vpack.c.b16 %v421, %v418
    %v449 = vpack.c.b16 %v422, %v419
    %v450 = vpack.c.b16 %v426, %v423
    %v451 = vpack.c.b16 %v427, %v424
    %v452 = vpack.c.b16 %v428, %v425
    %477 = vmatprep.subr.bf16.mxu0 %v430
    %478 = vmatpush1.bf16.msra.mxu0 %v429
    %479 = vmatprep.subr.bf16.mxu0 %v433
    %480 = vmatpush1.bf16.msra.mxu0 %v432
    %481 = vmatprep.subr.bf16.mxu0 %v436
    %482 = vmatpush1.bf16.msra.mxu0 %v435
    %483 = vmatprep.subr.bf16.mxu0 %v439
    %484 = vmatpush1.bf16.msra.mxu0 %v438
    %485 = vmatprep.subr.bf16.mxu0 %v442
    %486 = vmatpush1.bf16.msra.mxu0 %v441
    %487 = vmatprep.subr.bf16.mxu0 %v445
    %488 = vmatpush1.bf16.msra.mxu0 %v444
    %489 = vmatprep.subr.bf16.mxu0 %v448
    %490 = vmatpush1.bf16.msra.mxu0 %v447
    %491 = vmatprep.subr.bf16.mxu0 %v451
    %492 = vmatpush1.bf16.msra.mxu0 %v450
    %493 = vmatprep.subr.bf16.mxu0 0
    %494 = vmatpush1.bf16.msra.mxu0 0
    %495 = vmatprep.subr.bf16.mxu0 0
    %496 = vmatpush1.bf16.msra.mxu0 0
    %497 = vmatprep.subr.bf16.mxu0 0
    %498 = vmatpush1.bf16.msra.mxu0 0
    %499 = vmatprep.subr.bf16.mxu0 0
    %500 = vmatpush1.bf16.msra.mxu0 0
    %501 = vmatprep.subr.bf16.mxu0 0
    %502 = vmatpush1.bf16.msra.mxu0 0
    %503 = vmatprep.subr.bf16.mxu0 0
    %504 = vmatpush1.bf16.msra.mxu0 0
    %505 = vmatprep.subr.bf16.mxu0 0
    %506 = vmatpush1.bf16.msra.mxu0 0
    %507 = vmatprep.subr.bf16.mxu0 0
    %508 = vmatpush1.bf16.msra.mxu0 0
    %509 = vmatprep.mubr.bf16.mxu0 0
    %510 = vmatmul.mubr.bf16.gmra.mrb[0].mxu0 %v285
    %v511 = vpop.f32.mrb[0].mxu0
    %v512 = vadd.f32 %v145, %v511
    %v513 = vpop.f32.mrb[0].mxu0
    %v514 = vadd.f32 %v149, %v513
    %v515 = vpop.f32.mrb[0].mxu0
    %v516 = vadd.f32 %v145, %v515
    %v517 = vpop.f32.mrb[0].mxu0
    %v518 = vadd.f32 %v149, %v517
    %519 = vmatprep.mubr.bf16.mxu0 0
    %520 = vmatmul.mubr.bf16.gmra.mrb[0].mxu0 %v286
    %v521 = vpop.f32.mrb[0].mxu0
    %v522 = vadd.f32 %v145, %v521
    %v523 = vpop.f32.mrb[0].mxu0
    %v524 = vadd.f32 %v149, %v523
    %v525 = vpop.f32.mrb[0].mxu0
    %v526 = vadd.f32 %v145, %v525
    %v527 = vpop.f32.mrb[0].mxu0
    %v528 = vadd.f32 %v149, %v527
    %529 = vmatprep.mubr.bf16.mxu0 0
    %530 = vmatmul.mubr.bf16.gmra.mrb[0].mxu0 %v287
    %v531 = vpop.f32.mrb[0].mxu0
    %v532 = vadd.f32 %v145, %v531
    %v533 = vpop.f32.mrb[0].mxu0
    %v534 = vadd.f32 %v149, %v533
    %v535 = vpop.f32.mrb[0].mxu0
    %v536 = vadd.f32 %v145, %v535
    %v537 = vpop.f32.mrb[0].mxu0
    %v538 = vadd.f32 %v149, %v537
    %539 = vmatprep.mubr.bf16.mxu0 0
    %540 = vmatmul.mubr.bf16.gmra.mrb[0].mxu0 %v288
    %v541 = vpop.f32.mrb[0].mxu0
    %v542 = vadd.f32 %v145, %v541
    %v543 = vpop.f32.mrb[0].mxu0
    %v544 = vadd.f32 %v149, %v543
    %v545 = vpop.f32.mrb[0].mxu0
    %v546 = vadd.f32 %v145, %v545
    %v547 = vpop.f32.mrb[0].mxu0
    %v548 = vadd.f32 %v149, %v547
    %549 = vmatprep.mubr.bf16.mxu0 0
    %550 = vmatmul.mubr.bf16.gmra.mrb[0].mxu0 %v289
    %v551 = vpop.f32.mrb[0].mxu0
    %v552 = vadd.f32 %v145, %v551
    %v553 = vpop.f32.mrb[0].mxu0
    %v554 = vadd.f32 %v149, %v553
    %v555 = vpop.f32.mrb[0].mxu0
    %v556 = vadd.f32 %v145, %v555
    %v557 = vpop.f32.mrb[0].mxu0
    %v558 = vadd.f32 %v149, %v557
    %559 = vmatprep.mubr.bf16.mxu0 0
    %560 = vmatmul.mubr.bf16.gmra.mrb[0].mxu0 %v290
    %v561 = vpop.f32.mrb[0].mxu0
    %v562 = vadd.f32 %v145, %v561
    %v563 = vpop.f32.mrb[0].mxu0
    %v564 = vadd.f32 %v149, %v563
    %v565 = vpop.f32.mrb[0].mxu0
    %v566 = vadd.f32 %v145, %v565
    %v567 = vpop.f32.mrb[0].mxu0
    %v568 = vadd.f32 %v149, %v567
    %569 = vmatprep.mubr.bf16.mxu0 0
    %570 = vmatmul.mubr.bf16.gmra.mrb[0].mxu0 %v291
    %v571 = vpop.f32.mrb[0].mxu0
    %v572 = vadd.f32 %v145, %v571
    %v573 = vpop.f32.mrb[0].mxu0
    %v574 = vadd.f32 %v149, %v573
    %v575 = vpop.f32.mrb[0].mxu0
    %v576 = vadd.f32 %v145, %v575
    %v577 = vpop.f32.mrb[0].mxu0
    %v578 = vadd.f32 %v149, %v577
    %579 = vmatprep.mubr.bf16.mxu0 0
    %580 = vmatmul.mubr.bf16.gmra.mrb[0].mxu0 %v292
    %v581 = vpop.f32.mrb[0].mxu0
    %v582 = vadd.f32 %v145, %v581
    %v583 = vpop.f32.mrb[0].mxu0
    %v584 = vadd.f32 %v149, %v583
    %v585 = vpop.f32.mrb[0].mxu0
    %v586 = vadd.f32 %v145, %v585
    %v587 = vpop.f32.mrb[0].mxu0
    %v588 = vadd.f32 %v149, %v587
    %589 = vmatprep.mubr.bf16.mxu0 0
    %590 = vmatmul.mubr.bf16.gmra.mrb[0].mxu0 %v293
    %v591 = vpop.f32.mrb[0].mxu0
    %v592 = vadd.f32 %v145, %v591
    %v593 = vpop.f32.mrb[0].mxu0
    %v594 = vadd.f32 %v149, %v593
    %v595 = vpop.f32.mrb[0].mxu0
    %v596 = vadd.f32 %v145, %v595
    %v597 = vpop.f32.mrb[0].mxu0
    %v598 = vadd.f32 %v149, %v597
    %599 = vmatprep.mubr.bf16.mxu0 0
    %600 = vmatmul.mubr.bf16.gmra.mrb[0].mxu0 %v294
    %v601 = vpop.f32.mrb[0].mxu0
    %v602 = vadd.f32 %v145, %v601
    %v603 = vpop.f32.mrb[0].mxu0
    %v604 = vadd.f32 %v149, %v603
    %v605 = vpop.f32.mrb[0].mxu0
    %v606 = vadd.f32 %v145, %v605
    %v607 = vpop.f32.mrb[0].mxu0
    %v608 = vadd.f32 %v149, %v607
    %609 = vmatprep.mubr.bf16.mxu0 0
    %610 = vmatmul.mubr.bf16.gmra.mrb[0].mxu0 %v295
    %v611 = vpop.f32.mrb[0].mxu0
    %v612 = vadd.f32 %v145, %v611
    %v613 = vpop.f32.mrb[0].mxu0
    %v614 = vadd.f32 %v149, %v613
    %v615 = vpop.f32.mrb[0].mxu0
    %v616 = vadd.f32 %v145, %v615
    %v617 = vpop.f32.mrb[0].mxu0
    %v618 = vadd.f32 %v149, %v617
    %619 = vmatprep.mubr.bf16.mxu0 0
    %620 = vmatmul.mubr.bf16.gmra.mrb[0].mxu0 %v296
    %v621 = vpop.f32.mrb[0].mxu0
    %v622 = vadd.f32 %v145, %v621
    %v623 = vpop.f32.mrb[0].mxu0
    %v624 = vadd.f32 %v149, %v623
    %v625 = vpop.f32.mrb[0].mxu0
    %v626 = vadd.f32 %v145, %v625
    %v627 = vpop.f32.mrb[0].mxu0
    %v628 = vadd.f32 %v149, %v627
    %629 = vmatprep.mubr.bf16.mxu0 0
    %630 = vmatmul.mubr.bf16.gmra.mrb[0].mxu0 %v297
    %v631 = vpop.f32.mrb[0].mxu0
    %v632 = vadd.f32 %v145, %v631
    %v633 = vpop.f32.mrb[0].mxu0
    %v634 = vadd.f32 %v149, %v633
    %v635 = vpop.f32.mrb[0].mxu0
    %v636 = vadd.f32 %v145, %v635
    %v637 = vpop.f32.mrb[0].mxu0
    %v638 = vadd.f32 %v149, %v637
    %639 = vmatprep.mubr.bf16.mxu0 0
    %640 = vmatmul.mubr.bf16.gmra.mrb[0].mxu0 %v298
    %v641 = vpop.f32.mrb[0].mxu0
    %v642 = vadd.f32 %v145, %v641
    %v643 = vpop.f32.mrb[0].mxu0
    %v644 = vadd.f32 %v149, %v643
    %v645 = vpop.f32.mrb[0].mxu0
    %v646 = vadd.f32 %v145, %v645
    %v647 = vpop.f32.mrb[0].mxu0
    %v648 = vadd.f32 %v149, %v647
    %649 = vmatprep.mubr.bf16.mxu0 0
    %650 = vmatmul.mubr.bf16.gmra.mrb[0].mxu0 %v299
    %v651 = vpop.f32.mrb[0].mxu0
    %v652 = vadd.f32 %v145, %v651
    %v653 = vpop.f32.mrb[0].mxu0
    %v654 = vadd.f32 %v149, %v653
    %v655 = vpop.f32.mrb[0].mxu0
    %v656 = vadd.f32 %v145, %v655
    %v657 = vpop.f32.mrb[0].mxu0
    %v658 = vadd.f32 %v149, %v657
    %659 = vmatprep.mubr.bf16.mxu0 0
    %660 = vmatmul.mubr.bf16.gmra.mrb[0].mxu0 %v300
    %v661 = vpop.f32.mrb[0].mxu0
    %v662 = vadd.f32 %v145, %v661
    %v663 = vpop.f32.mrb[0].mxu0
    %v664 = vadd.f32 %v149, %v663
    %v665 = vpop.f32.mrb[0].mxu0
    %v666 = vadd.f32 %v145, %v665
    %v667 = vpop.f32.mrb[0].mxu0
    %v668 = vadd.f32 %v149, %v667
    %669 = vmatprep.mubr.bf16.mxu0 0
    %670 = vmatmul.mubr.bf16.gmra.mrb[0].mxu0 %v301
    %v671 = vpop.f32.mrb[0].mxu0
    %v672 = vadd.f32 %v145, %v671
    %v673 = vpop.f32.mrb[0].mxu0
    %v674 = vadd.f32 %v149, %v673
    %v675 = vpop.f32.mrb[0].mxu0
    %v676 = vadd.f32 %v145, %v675
    %v677 = vpop.f32.mrb[0].mxu0
    %v678 = vadd.f32 %v149, %v677
    %679 = vmatprep.mubr.bf16.mxu0 0
    %680 = vmatmul.mubr.bf16.gmra.mrb[0].mxu0 %v302
    %v681 = vpop.f32.mrb[0].mxu0
    %v682 = vadd.f32 %v145, %v681
    %v683 = vpop.f32.mrb[0].mxu0
    %v684 = vadd.f32 %v149, %v683
    %v685 = vpop.f32.mrb[0].mxu0
    %v686 = vadd.f32 %v145, %v685
    %v687 = vpop.f32.mrb[0].mxu0
    %v688 = vadd.f32 %v149, %v687
    %689 = vmatprep.mubr.bf16.mxu0 0
    %690 = vmatmul.mubr.bf16.gmra.mrb[0].mxu0 %v303
    %v691 = vpop.f32.mrb[0].mxu0
    %v692 = vadd.f32 %v145, %v691
    %v693 = vpop.f32.mrb[0].mxu0
    %v694 = vadd.f32 %v149, %v693
    %v695 = vpop.f32.mrb[0].mxu0
    %v696 = vadd.f32 %v145, %v695
    %v697 = vpop.f32.mrb[0].mxu0
    %v698 = vadd.f32 %v149, %v697
    %699 = vmatprep.mubr.bf16.mxu0 0
    %700 = vmatmul.mubr.bf16.gmra.mrb[0].mxu0 %v304
    %v701 = vpop.f32.mrb[0].mxu0
    %v702 = vadd.f32 %v145, %v701
    %v703 = vpop.f32.mrb[0].mxu0
    %v704 = vadd.f32 %v149, %v703
    %v705 = vpop.f32.mrb[0].mxu0
    %v706 = vadd.f32 %v145, %v705
    %v707 = vpop.f32.mrb[0].mxu0
    %v708 = vadd.f32 %v149, %v707
    %709 = vmatprep.mubr.bf16.mxu0 0
    %710 = vmatmul.mubr.bf16.gmra.mrb[0].mxu0 %v305
    %v711 = vpop.f32.mrb[0].mxu0
    %v712 = vadd.f32 %v145, %v711
    %v713 = vpop.f32.mrb[0].mxu0
    %v714 = vadd.f32 %v149, %v713
    %v715 = vpop.f32.mrb[0].mxu0
    %v716 = vadd.f32 %v145, %v715
    %v717 = vpop.f32.mrb[0].mxu0
    %v718 = vadd.f32 %v149, %v717
    %719 = vmatprep.mubr.bf16.mxu0 0
    %720 = vmatmul.mubr.bf16.gmra.mrb[0].mxu0 %v306
    %v721 = vpop.f32.mrb[0].mxu0
    %v722 = vadd.f32 %v145, %v721
    %v723 = vpop.f32.mrb[0].mxu0
    %v724 = vadd.f32 %v149, %v723
    %v725 = vpop.f32.mrb[0].mxu0
    %v726 = vadd.f32 %v145, %v725
    %v727 = vpop.f32.mrb[0].mxu0
    %v728 = vadd.f32 %v149, %v727
    %729 = vmatprep.mubr.bf16.mxu0 0
    %730 = vmatmul.mubr.bf16.gmra.mrb[0].mxu0 %v307
    %v731 = vpop.f32.mrb[0].mxu0
    %v732 = vadd.f32 %v145, %v731
    %v733 = vpop.f32.mrb[0].mxu0
    %v734 = vadd.f32 %v149, %v733
    %v735 = vpop.f32.mrb[0].mxu0
    %v736 = vadd.f32 %v145, %v735
    %v737 = vpop.f32.mrb[0].mxu0
    %v738 = vadd.f32 %v149, %v737
    %739 = vmatprep.mubr.bf16.mxu0 0
    %740 = vmatmul.mubr.bf16.gmra.mrb[0].mxu0 %v308
    %v741 = vpop.f32.mrb[0].mxu0
    %v742 = vadd.f32 %v145, %v741
    %v743 = vpop.f32.mrb[0].mxu0
    %v744 = vadd.f32 %v149, %v743
    %v745 = vpop.f32.mrb[0].mxu0
    %v746 = vadd.f32 %v145, %v745
    %v747 = vpop.f32.mrb[0].mxu0
    %v748 = vadd.f32 %v149, %v747
    %749 = vmatprep.mubr.bf16.mxu0 0
    %750 = vmatmul.mubr.bf16.gmra.mrb[0].mxu0 %v309
    %v751 = vpop.f32.mrb[0].mxu0
    %v752 = vadd.f32 %v145, %v751
    %v753 = vpop.f32.mrb[0].mxu0
    %v754 = vadd.f32 %v149, %v753
    %v755 = vpop.f32.mrb[0].mxu0
    %v756 = vadd.f32 %v145, %v755
    %v757 = vpop.f32.mrb[0].mxu0
    %v758 = vadd.f32 %v149, %v757
    %759 = vmatprep.mubr.bf16.mxu0 0
    %760 = vmatmul.mubr.bf16.gmra.mrb[0].mxu0 %v310
    %v761 = vpop.f32.mrb[0].mxu0
    %v762 = vadd.f32 %v145, %v761
    %v763 = vpop.f32.mrb[0].mxu0
    %v764 = vadd.f32 %v149, %v763
    %v765 = vpop.f32.mrb[0].mxu0
    %v766 = vadd.f32 %v145, %v765
    %v767 = vpop.f32.mrb[0].mxu0
    %v768 = vadd.f32 %v149, %v767
    %769 = vmatprep.mubr.bf16.mxu0 0
    %770 = vmatmul.mubr.bf16.gmra.mrb[0].mxu0 %v311
    %v771 = vpop.f32.mrb[0].mxu0
    %v772 = vadd.f32 %v145, %v771
    %v773 = vpop.f32.mrb[0].mxu0
    %v774 = vadd.f32 %v149, %v773
    %v775 = vpop.f32.mrb[0].mxu0
    %v776 = vadd.f32 %v145, %v775
    %v777 = vpop.f32.mrb[0].mxu0
    %v778 = vadd.f32 %v149, %v777
    %779 = vmatprep.mubr.bf16.mxu0 0
    %780 = vmatmul.mubr.bf16.gmra.mrb[0].mxu0 %v312
    %v781 = vpop.f32.mrb[0].mxu0
    %v782 = vadd.f32 %v145, %v781
    %v783 = vpop.f32.mrb[0].mxu0
    %v784 = vadd.f32 %v149, %v783
    %v785 = vpop.f32.mrb[0].mxu0
    %v786 = vadd.f32 %v145, %v785
    %v787 = vpop.f32.mrb[0].mxu0
    %v788 = vadd.f32 %v149, %v787
    %789 = vmatprep.mubr.bf16.mxu0 0
    %790 = vmatmul.mubr.bf16.gmra.mrb[0].mxu0 %v313
    %v791 = vpop.f32.mrb[0].mxu0
    %v792 = vadd.f32 %v145, %v791
    %v793 = vpop.f32.mrb[0].mxu0
    %v794 = vadd.f32 %v149, %v793
    %v795 = vpop.f32.mrb[0].mxu0
    %v796 = vadd.f32 %v145, %v795
    %v797 = vpop.f32.mrb[0].mxu0
    %v798 = vadd.f32 %v149, %v797
    %799 = vmatprep.mubr.bf16.mxu0 0
    %800 = vmatmul.mubr.bf16.gmra.mrb[0].mxu0 %v314
    %v801 = vpop.f32.mrb[0].mxu0
    %v802 = vadd.f32 %v145, %v801
    %v803 = vpop.f32.mrb[0].mxu0
    %v804 = vadd.f32 %v149, %v803
    %v805 = vpop.f32.mrb[0].mxu0
    %v806 = vadd.f32 %v145, %v805
    %v807 = vpop.f32.mrb[0].mxu0
    %v808 = vadd.f32 %v149, %v807
    %809 = vmatprep.mubr.bf16.mxu0 0
    %810 = vmatmul.mubr.bf16.gmra.mrb[0].mxu0 %v315
    %v811 = vpop.f32.mrb[0].mxu0
    %v812 = vadd.f32 %v145, %v811
    %v813 = vpop.f32.mrb[0].mxu0
    %v814 = vadd.f32 %v149, %v813
    %v815 = vpop.f32.mrb[0].mxu0
    %v816 = vadd.f32 %v145, %v815
    %v817 = vpop.f32.mrb[0].mxu0
    %v818 = vadd.f32 %v149, %v817
    %819 = vmatprep.mubr.bf16.mxu0 0
    %820 = vmatmul.mubr.bf16.gmra.mrb[0].mxu0 %v316
    %v821 = vpop.f32.mrb[0].mxu0
    %v822 = vadd.f32 %v145, %v821
    %v823 = vpop.f32.mrb[0].mxu0
    %v824 = vadd.f32 %v149, %v823
    %v825 = vpop.f32.mrb[0].mxu0
    %v826 = vadd.f32 %v145, %v825
    %v827 = vpop.f32.mrb[0].mxu0
    %v828 = vadd.f32 %v149, %v827
    %829 = vdwg.mxu0
    %830 = vmatprep.subr.bf16.mxu0 0
    %831 = vmatpush1.bf16.msra.mxu0 %v431
    %832 = vmatprep.subr.bf16.mxu0 0
    %833 = vmatpush1.bf16.msra.mxu0 %v434
    %834 = vmatprep.subr.bf16.mxu0 0
    %835 = vmatpush1.bf16.msra.mxu0 %v437
    %836 = vmatprep.subr.bf16.mxu0 0
    %837 = vmatpush1.bf16.msra.mxu0 %v440
    %838 = vmatprep.subr.bf16.mxu0 0
    %839 = vmatpush1.bf16.msra.mxu0 %v443
    %840 = vmatprep.subr.bf16.mxu0 0
    %841 = vmatpush1.bf16.msra.mxu0 %v446
    %842 = vmatprep.subr.bf16.mxu0 0
    %843 = vmatpush1.bf16.msra.mxu0 %v449
    %844 = vmatprep.subr.bf16.mxu0 0
    %845 = vmatpush1.bf16.msra.mxu0 %v452
    %846 = vmatprep.subr.bf16.mxu0 0
    %847 = vmatpush1.bf16.msra.mxu0 0
    %848 = vmatprep.subr.bf16.mxu0 0
    %849 = vmatpush1.bf16.msra.mxu0 0
    %850 = vmatprep.subr.bf16.mxu0 0
    %851 = vmatpush1.bf16.msra.mxu0 0
    %852 = vmatprep.subr.bf16.mxu0 0
    %853 = vmatpush1.bf16.msra.mxu0 0
    %854 = vmatprep.subr.bf16.mxu0 0
    %855 = vmatpush1.bf16.msra.mxu0 0
    %856 = vmatprep.subr.bf16.mxu0 0
    %857 = vmatpush1.bf16.msra.mxu0 0
    %858 = vmatprep.subr.bf16.mxu0 0
    %859 = vmatpush1.bf16.msra.mxu0 0
    %860 = vmatprep.subr.bf16.mxu0 0
    %861 = vmatpush1.bf16.msra.mxu0 0
    %862 = vmatprep.mubr.bf16.mxu0 0
    %863 = vmatmul.mubr.bf16.gmra.mrb[0].mxu0 %v285
    %v864 = vpop.f32.mrb[0].mxu0
    %v865 = vadd.f32 %v153, %v864
    %v866 = vpop.f32.mrb[0].mxu0
    %v867 = vpop.f32.mrb[0].mxu0
    %v868 = vadd.f32 %v153, %v867
    %v869 = vpop.f32.mrb[0].mxu0
    %870 = vmatprep.mubr.bf16.mxu0 0
    %871 = vmatmul.mubr.bf16.gmra.mrb[0].mxu0 %v286
    %v872 = vpop.f32.mrb[0].mxu0
    %v873 = vadd.f32 %v153, %v872
    %v874 = vpop.f32.mrb[0].mxu0
    %v875 = vpop.f32.mrb[0].mxu0
    %v876 = vadd.f32 %v153, %v875
    %v877 = vpop.f32.mrb[0].mxu0
    %878 = vmatprep.mubr.bf16.mxu0 0
    %879 = vmatmul.mubr.bf16.gmra.mrb[0].mxu0 %v287
    %v880 = vpop.f32.mrb[0].mxu0
    %v881 = vadd.f32 %v153, %v880
    %v882 = vpop.f32.mrb[0].mxu0
    %v883 = vpop.f32.mrb[0].mxu0
    %v884 = vadd.f32 %v153, %v883
    %v885 = vpop.f32.mrb[0].mxu0
    %886 = vmatprep.mubr.bf16.mxu0 0
    %887 = vmatmul.mubr.bf16.gmra.mrb[0].mxu0 %v288
    %v888 = vpop.f32.mrb[0].mxu0
    %v889 = vadd.f32 %v153, %v888
    %v890 = vpop.f32.mrb[0].mxu0
    %v891 = vpop.f32.mrb[0].mxu0
    %v892 = vadd.f32 %v153, %v891
    %v893 = vpop.f32.mrb[0].mxu0
    %894 = vmatprep.mubr.bf16.mxu0 0
    %895 = vmatmul.mubr.bf16.gmra.mrb[0].mxu0 %v289
    %v896 = vpop.f32.mrb[0].mxu0
    %v897 = vadd.f32 %v153, %v896
    %v898 = vpop.f32.mrb[0].mxu0
    %v899 = vpop.f32.mrb[0].mxu0
    %v900 = vadd.f32 %v153, %v899
    %v901 = vpop.f32.mrb[0].mxu0
    %902 = vmatprep.mubr.bf16.mxu0 0
    %903 = vmatmul.mubr.bf16.gmra.mrb[0].mxu0 %v290
    %v904 = vpop.f32.mrb[0].mxu0
    %v905 = vadd.f32 %v153, %v904
    %v906 = vpop.f32.mrb[0].mxu0
    %v907 = vpop.f32.mrb[0].mxu0
    %v908 = vadd.f32 %v153, %v907
    %v909 = vpop.f32.mrb[0].mxu0
    %910 = vmatprep.mubr.bf16.mxu0 0
    %911 = vmatmul.mubr.bf16.gmra.mrb[0].mxu0 %v291
    %v912 = vpop.f32.mrb[0].mxu0
    %v913 = vadd.f32 %v153, %v912
    %v914 = vpop.f32.mrb[0].mxu0
    %v915 = vpop.f32.mrb[0].mxu0
    %v916 = vadd.f32 %v153, %v915
    %v917 = vpop.f32.mrb[0].mxu0
    %918 = vmatprep.mubr.bf16.mxu0 0
    %919 = vmatmul.mubr.bf16.gmra.mrb[0].mxu0 %v292
    %v920 = vpop.f32.mrb[0].mxu0
    %v921 = vadd.f32 %v153, %v920
    %v922 = vpop.f32.mrb[0].mxu0
    %v923 = vpop.f32.mrb[0].mxu0
    %v924 = vadd.f32 %v153, %v923
    %v925 = vpop.f32.mrb[0].mxu0
    %926 = vmatprep.mubr.bf16.mxu0 0
    %927 = vmatmul.mubr.bf16.gmra.mrb[0].mxu0 %v293
    %v928 = vpop.f32.mrb[0].mxu0
    %v929 = vadd.f32 %v153, %v928
    %v930 = vpop.f32.mrb[0].mxu0
    %v931 = vpop.f32.mrb[0].mxu0
    %v932 = vadd.f32 %v153, %v931
    %v933 = vpop.f32.mrb[0].mxu0
    %934 = vmatprep.mubr.bf16.mxu0 0
    %935 = vmatmul.mubr.bf16.gmra.mrb[0].mxu0 %v294
    %v936 = vpop.f32.mrb[0].mxu0
    %v937 = vadd.f32 %v153, %v936
    %v938 = vpop.f32.mrb[0].mxu0
    %v939 = vpop.f32.mrb[0].mxu0
    %v940 = vadd.f32 %v153, %v939
    %v941 = vpop.f32.mrb[0].mxu0
    %942 = vmatprep.mubr.bf16.mxu0 0
    %943 = vmatmul.mubr.bf16.gmra.mrb[0].mxu0 %v295
    %v944 = vpop.f32.mrb[0].mxu0
    %v945 = vadd.f32 %v153, %v944
    %v946 = vpop.f32.mrb[0].mxu0
    %v947 = vpop.f32.mrb[0].mxu0
    %v948 = vadd.f32 %v153, %v947
    %v949 = vpop.f32.mrb[0].mxu0
    %950 = vmatprep.mubr.bf16.mxu0 0
    %951 = vmatmul.mubr.bf16.gmra.mrb[0].mxu0 %v296
    %v952 = vpop.f32.mrb[0].mxu0
    %v953 = vadd.f32 %v153, %v952
    %v954 = vpop.f32.mrb[0].mxu0
    %v955 = vpop.f32.mrb[0].mxu0
    %v956 = vadd.f32 %v153, %v955
    %v957 = vpop.f32.mrb[0].mxu0
    %958 = vmatprep.mubr.bf16.mxu0 0
    %959 = vmatmul.mubr.bf16.gmra.mrb[0].mxu0 %v297
    %v960 = vpop.f32.mrb[0].mxu0
    %v961 = vadd.f32 %v153, %v960
    %v962 = vpop.f32.mrb[0].mxu0
    %v963 = vpop.f32.mrb[0].mxu0
    %v964 = vadd.f32 %v153, %v963
    %v965 = vpop.f32.mrb[0].mxu0
    %966 = vmatprep.mubr.bf16.mxu0 0
    %967 = vmatmul.mubr.bf16.gmra.mrb[0].mxu0 %v298
    %v968 = vpop.f32.mrb[0].mxu0
    %v969 = vadd.f32 %v153, %v968
    %v970 = vpop.f32.mrb[0].mxu0
    %v971 = vpop.f32.mrb[0].mxu0
    %v972 = vadd.f32 %v153, %v971
    %v973 = vpop.f32.mrb[0].mxu0
    %974 = vmatprep.mubr.bf16.mxu0 0
    %975 = vmatmul.mubr.bf16.gmra.mrb[0].mxu0 %v299
    %v976 = vpop.f32.mrb[0].mxu0
    %v977 = vadd.f32 %v153, %v976
    %v978 = vpop.f32.mrb[0].mxu0
    %v979 = vpop.f32.mrb[0].mxu0
    %v980 = vadd.f32 %v153, %v979
    %v981 = vpop.f32.mrb[0].mxu0
    %982 = vmatprep.mubr.bf16.mxu0 0
    %983 = vmatmul.mubr.bf16.gmra.mrb[0].mxu0 %v300
    %v984 = vpop.f32.mrb[0].mxu0
    %v985 = vadd.f32 %v153, %v984
    %v986 = vpop.f32.mrb[0].mxu0
    %v987 = vpop.f32.mrb[0].mxu0
    %v988 = vadd.f32 %v153, %v987
    %v989 = vpop.f32.mrb[0].mxu0
    %990 = vmatprep.mubr.bf16.mxu0 0
    %991 = vmatmul.mubr.bf16.gmra.mrb[0].mxu0 %v301
    %v992 = vpop.f32.mrb[0].mxu0
    %v993 = vadd.f32 %v153, %v992
    %v994 = vpop.f32.mrb[0].mxu0
    %v995 = vpop.f32.mrb[0].mxu0
    %v996 = vadd.f32 %v153, %v995
    %v997 = vpop.f32.mrb[0].mxu0
    %998 = vmatprep.mubr.bf16.mxu0 0
    %999 = vmatmul.mubr.bf16.gmra.mrb[0].mxu0 %v302
    %v1000 = vpop.f32.mrb[0].mxu0
    %v1001 = vadd.f32 %v153, %v1000
    %v1002 = vpop.f32.mrb[0].mxu0
    %v1003 = vpop.f32.mrb[0].mxu0
    %v1004 = vadd.f32 %v153, %v1003
    %v1005 = vpop.f32.mrb[0].mxu0
    %1006 = vmatprep.mubr.bf16.mxu0 0
    %1007 = vmatmul.mubr.bf16.gmra.mrb[0].mxu0 %v303
    %v1008 = vpop.f32.mrb[0].mxu0
    %v1009 = vadd.f32 %v153, %v1008
    %v1010 = vpop.f32.mrb[0].mxu0
    %v1011 = vpop.f32.mrb[0].mxu0
    %v1012 = vadd.f32 %v153, %v1011
    %v1013 = vpop.f32.mrb[0].mxu0
    %1014 = vmatprep.mubr.bf16.mxu0 0
    %1015 = vmatmul.mubr.bf16.gmra.mrb[0].mxu0 %v304
    %v1016 = vpop.f32.mrb[0].mxu0
    %v1017 = vadd.f32 %v153, %v1016
    %v1018 = vpop.f32.mrb[0].mxu0
    %v1019 = vpop.f32.mrb[0].mxu0
    %v1020 = vadd.f32 %v153, %v1019
    %v1021 = vpop.f32.mrb[0].mxu0
    %1022 = vmatprep.mubr.bf16.mxu0 0
    %1023 = vmatmul.mubr.bf16.gmra.mrb[0].mxu0 %v305
    %v1024 = vpop.f32.mrb[0].mxu0
    %v1025 = vadd.f32 %v153, %v1024
    %v1026 = vpop.f32.mrb[0].mxu0
    %v1027 = vpop.f32.mrb[0].mxu0
    %v1028 = vadd.f32 %v153, %v1027
    %v1029 = vpop.f32.mrb[0].mxu0
    %1030 = vmatprep.mubr.bf16.mxu0 0
    %1031 = vmatmul.mubr.bf16.gmra.mrb[0].mxu0 %v306
    %v1032 = vpop.f32.mrb[0].mxu0
    %v1033 = vadd.f32 %v153, %v1032
    %v1034 = vpop.f32.mrb[0].mxu0
    %v1035 = vpop.f32.mrb[0].mxu0
    %v1036 = vadd.f32 %v153, %v1035
    %v1037 = vpop.f32.mrb[0].mxu0
    %1038 = vmatprep.mubr.bf16.mxu0 0
    %1039 = vmatmul.mubr.bf16.gmra.mrb[0].mxu0 %v307
    %v1040 = vpop.f32.mrb[0].mxu0
    %v1041 = vadd.f32 %v153, %v1040
    %v1042 = vpop.f32.mrb[0].mxu0
    %v1043 = vpop.f32.mrb[0].mxu0
    %v1044 = vadd.f32 %v153, %v1043
    %v1045 = vpop.f32.mrb[0].mxu0
    %1046 = vmatprep.mubr.bf16.mxu0 0
    %1047 = vmatmul.mubr.bf16.gmra.mrb[0].mxu0 %v308
    %v1048 = vpop.f32.mrb[0].mxu0
    %v1049 = vadd.f32 %v153, %v1048
    %v1050 = vpop.f32.mrb[0].mxu0
    %v1051 = vpop.f32.mrb[0].mxu0
    %v1052 = vadd.f32 %v153, %v1051
    %v1053 = vpop.f32.mrb[0].mxu0
    %1054 = vmatprep.mubr.bf16.mxu0 0
    %1055 = vmatmul.mubr.bf16.gmra.mrb[0].mxu0 %v309
    %v1056 = vpop.f32.mrb[0].mxu0
    %v1057 = vadd.f32 %v153, %v1056
    %v1058 = vpop.f32.mrb[0].mxu0
    %v1059 = vpop.f32.mrb[0].mxu0
    %v1060 = vadd.f32 %v153, %v1059
    %v1061 = vpop.f32.mrb[0].mxu0
    %1062 = vmatprep.mubr.bf16.mxu0 0
    %1063 = vmatmul.mubr.bf16.gmra.mrb[0].mxu0 %v310
    %v1064 = vpop.f32.mrb[0].mxu0
    %v1065 = vadd.f32 %v153, %v1064
    %v1066 = vpop.f32.mrb[0].mxu0
    %v1067 = vpop.f32.mrb[0].mxu0
    %v1068 = vadd.f32 %v153, %v1067
    %v1069 = vpop.f32.mrb[0].mxu0
    %1070 = vmatprep.mubr.bf16.mxu0 0
    %1071 = vmatmul.mubr.bf16.gmra.mrb[0].mxu0 %v311
    %v1072 = vpop.f32.mrb[0].mxu0
    %v1073 = vadd.f32 %v153, %v1072
    %v1074 = vpop.f32.mrb[0].mxu0
    %v1075 = vpop.f32.mrb[0].mxu0
    %v1076 = vadd.f32 %v153, %v1075
    %v1077 = vpop.f32.mrb[0].mxu0
    %1078 = vmatprep.mubr.bf16.mxu0 0
    %1079 = vmatmul.mubr.bf16.gmra.mrb[0].mxu0 %v312
    %v1080 = vpop.f32.mrb[0].mxu0
    %v1081 = vadd.f32 %v153, %v1080
    %v1082 = vpop.f32.mrb[0].mxu0
    %v1083 = vpop.f32.mrb[0].mxu0
    %v1084 = vadd.f32 %v153, %v1083
    %v1085 = vpop.f32.mrb[0].mxu0
    %1086 = vmatprep.mubr.bf16.mxu0 0
    %1087 = vmatmul.mubr.bf16.gmra.mrb[0].mxu0 %v313
    %v1088 = vpop.f32.mrb[0].mxu0
    %v1089 = vadd.f32 %v153, %v1088
    %v1090 = vpop.f32.mrb[0].mxu0
    %v1091 = vpop.f32.mrb[0].mxu0
    %v1092 = vadd.f32 %v153, %v1091
    %v1093 = vpop.f32.mrb[0].mxu0
    %1094 = vmatprep.mubr.bf16.mxu0 0
    %1095 = vmatmul.mubr.bf16.gmra.mrb[0].mxu0 %v314
    %v1096 = vpop.f32.mrb[0].mxu0
    %v1097 = vadd.f32 %v153, %v1096
    %v1098 = vpop.f32.mrb[0].mxu0
    %v1099 = vpop.f32.mrb[0].mxu0
    %v1100 = vadd.f32 %v153, %v1099
    %v1101 = vpop.f32.mrb[0].mxu0
    %1102 = vmatprep.mubr.bf16.mxu0 0
    %1103 = vmatmul.mubr.bf16.gmra.mrb[0].mxu0 %v315
    %v1104 = vpop.f32.mrb[0].mxu0
    %v1105 = vadd.f32 %v153, %v1104
    %v1106 = vpop.f32.mrb[0].mxu0
    %v1107 = vpop.f32.mrb[0].mxu0
    %v1108 = vadd.f32 %v153, %v1107
    %v1109 = vpop.f32.mrb[0].mxu0
    %1110 = vmatprep.mubr.bf16.mxu0 0
    %1111 = vmatmul.mubr.bf16.gmra.mrb[0].mxu0 %v316
    %v1112 = vpop.f32.mrb[0].mxu0
    %v1113 = vadd.f32 %v153, %v1112
    %v1114 = vpop.f32.mrb[0].mxu0
    %v1115 = vpop.f32.mrb[0].mxu0
    %v1116 = vadd.f32 %v153, %v1115
    %v1117 = vpop.f32.mrb[0].mxu0
    %1118 = vdwg.mxu0
    %v1119 = vpack.c.bf16 %v516, %v512
    %v1120 = vpack.c.bf16 %v518, %v514
    %v1121 = vpack.c.bf16 %v868, %v865
    %v1122 = vpack.c.bf16 %v526, %v522
    %v1123 = vpack.c.bf16 %v528, %v524
    %v1124 = vpack.c.bf16 %v876, %v873
    %v1125 = vpack.c.bf16 %v536, %v532
    %v1126 = vpack.c.bf16 %v538, %v534
    %v1127 = vpack.c.bf16 %v884, %v881
    %v1128 = vpack.c.bf16 %v546, %v542
    %v1129 = vpack.c.bf16 %v548, %v544
    %v1130 = vpack.c.bf16 %v892, %v889
    %v1131 = vpack.c.bf16 %v556, %v552
    %v1132 = vpack.c.bf16 %v558, %v554
    %v1133 = vpack.c.bf16 %v900, %v897
    %v1134 = vpack.c.bf16 %v566, %v562
    %v1135 = vpack.c.bf16 %v568, %v564
    %v1136 = vpack.c.bf16 %v908, %v905
    %v1137 = vpack.c.bf16 %v576, %v572
    %v1138 = vpack.c.bf16 %v578, %v574
    %v1139 = vpack.c.bf16 %v916, %v913
    %v1140 = vpack.c.bf16 %v586, %v582
    %v1141 = vpack.c.bf16 %v588, %v584
    %v1142 = vpack.c.bf16 %v924, %v921
    %v1143 = vpack.c.bf16 %v596, %v592
    %v1144 = vpack.c.bf16 %v598, %v594
    %v1145 = vpack.c.bf16 %v932, %v929
    %v1146 = vpack.c.bf16 %v606, %v602
    %v1147 = vpack.c.bf16 %v608, %v604
    %v1148 = vpack.c.bf16 %v940, %v937
    %v1149 = vpack.c.bf16 %v616, %v612
    %v1150 = vpack.c.bf16 %v618, %v614
    %v1151 = vpack.c.bf16 %v948, %v945
    %v1152 = vpack.c.bf16 %v626, %v622
    %v1153 = vpack.c.bf16 %v628, %v624
    %v1154 = vpack.c.bf16 %v956, %v953
    %v1155 = vpack.c.bf16 %v636, %v632
    %v1156 = vpack.c.bf16 %v638, %v634
    %v1157 = vpack.c.bf16 %v964, %v961
    %v1158 = vpack.c.bf16 %v646, %v642
    %v1159 = vpack.c.bf16 %v648, %v644
    %v1160 = vpack.c.bf16 %v972, %v969
    %v1161 = vpack.c.bf16 %v656, %v652
    %v1162 = vpack.c.bf16 %v658, %v654
    %v1163 = vpack.c.bf16 %v980, %v977
    %v1164 = vpack.c.bf16 %v666, %v662
    %v1165 = vpack.c.bf16 %v668, %v664
    %v1166 = vpack.c.bf16 %v988, %v985
    %v1167 = vpack.c.bf16 %v676, %v672
    %v1168 = vpack.c.bf16 %v678, %v674
    %v1169 = vpack.c.bf16 %v996, %v993
    %v1170 = vpack.c.bf16 %v686, %v682
    %v1171 = vpack.c.bf16 %v688, %v684
    %v1172 = vpack.c.bf16 %v1004, %v1001
    %v1173 = vpack.c.bf16 %v696, %v692
    %v1174 = vpack.c.bf16 %v698, %v694
    %v1175 = vpack.c.bf16 %v1012, %v1009
    %v1176 = vpack.c.bf16 %v706, %v702
    %v1177 = vpack.c.bf16 %v708, %v704
    %v1178 = vpack.c.bf16 %v1020, %v1017
    %v1179 = vpack.c.bf16 %v716, %v712
    %v1180 = vpack.c.bf16 %v718, %v714
    %v1181 = vpack.c.bf16 %v1028, %v1025
    %v1182 = vpack.c.bf16 %v726, %v722
    %v1183 = vpack.c.bf16 %v728, %v724
    %v1184 = vpack.c.bf16 %v1036, %v1033
    %v1185 = vpack.c.bf16 %v736, %v732
    %v1186 = vpack.c.bf16 %v738, %v734
    %v1187 = vpack.c.bf16 %v1044, %v1041
    %v1188 = vpack.c.bf16 %v746, %v742
    %v1189 = vpack.c.bf16 %v748, %v744
    %v1190 = vpack.c.bf16 %v1052, %v1049
    %v1191 = vpack.c.bf16 %v756, %v752
    %v1192 = vpack.c.bf16 %v758, %v754
    %v1193 = vpack.c.bf16 %v1060, %v1057
    %v1194 = vpack.c.bf16 %v766, %v762
    %v1195 = vpack.c.bf16 %v768, %v764
    %v1196 = vpack.c.bf16 %v1068, %v1065
    %v1197 = vpack.c.bf16 %v776, %v772
    %v1198 = vpack.c.bf16 %v778, %v774
    %v1199 = vpack.c.bf16 %v1076, %v1073
    %v1200 = vpack.c.bf16 %v786, %v782
    %v1201 = vpack.c.bf16 %v788, %v784
    %v1202 = vpack.c.bf16 %v1084, %v1081
    %v1203 = vpack.c.bf16 %v796, %v792
    %v1204 = vpack.c.bf16 %v798, %v794
    %v1205 = vpack.c.bf16 %v1092, %v1089
    %v1206 = vpack.c.bf16 %v806, %v802
    %v1207 = vpack.c.bf16 %v808, %v804
    %v1208 = vpack.c.bf16 %v1100, %v1097
    %v1209 = vpack.c.bf16 %v816, %v812
    %v1210 = vpack.c.bf16 %v818, %v814
    %v1211 = vpack.c.bf16 %v1108, %v1105
    %v1212 = vpack.c.bf16 %v826, %v822
    %v1213 = vpack.c.bf16 %v828, %v824
    %v1214 = vpack.c.bf16 %v1116, %v1113
    %v1311 = vunpack.c.l.b16 %v1119
    %v1312 = vunpack.c.l.b16 %v1120
    %v1313 = vunpack.c.l.b16 %v1121
    %v1314 = vunpack.c.h.b16 %v1119
    %v1315 = vunpack.c.h.b16 %v1120
    %v1316 = vunpack.c.h.b16 %v1121
    %v1317 = vunpack.c.l.b16 %v1122
    %v1318 = vunpack.c.l.b16 %v1123
    %v1319 = vunpack.c.l.b16 %v1124
    %v1320 = vunpack.c.h.b16 %v1122
    %v1321 = vunpack.c.h.b16 %v1123
    %v1322 = vunpack.c.h.b16 %v1124
    %v1323 = vunpack.c.l.b16 %v1125
    %v1324 = vunpack.c.l.b16 %v1126
    %v1325 = vunpack.c.l.b16 %v1127
    %v1326 = vunpack.c.h.b16 %v1125
    %v1327 = vunpack.c.h.b16 %v1126
    %v1328 = vunpack.c.h.b16 %v1127
    %v1329 = vunpack.c.l.b16 %v1128
    %v1330 = vunpack.c.l.b16 %v1129
    %v1331 = vunpack.c.l.b16 %v1130
    %v1332 = vunpack.c.h.b16 %v1128
    %v1333 = vunpack.c.h.b16 %v1129
    %v1334 = vunpack.c.h.b16 %v1130
    %v1335 = vunpack.c.l.b16 %v1131
    %v1336 = vunpack.c.l.b16 %v1132
    %v1337 = vunpack.c.l.b16 %v1133
    %v1338 = vunpack.c.h.b16 %v1131
    %v1339 = vunpack.c.h.b16 %v1132
    %v1340 = vunpack.c.h.b16 %v1133
    %v1341 = vunpack.c.l.b16 %v1134
    %v1342 = vunpack.c.l.b16 %v1135
    %v1343 = vunpack.c.l.b16 %v1136
    %v1344 = vunpack.c.h.b16 %v1134
    %v1345 = vunpack.c.h.b16 %v1135
    %v1346 = vunpack.c.h.b16 %v1136
    %v1347 = vunpack.c.l.b16 %v1137
    %v1348 = vunpack.c.l.b16 %v1138
    %v1349 = vunpack.c.l.b16 %v1139
    %v1350 = vunpack.c.h.b16 %v1137
    %v1351 = vunpack.c.h.b16 %v1138
    %v1352 = vunpack.c.h.b16 %v1139
    %v1353 = vunpack.c.l.b16 %v1140
    %v1354 = vunpack.c.l.b16 %v1141
    %v1355 = vunpack.c.l.b16 %v1142
    %v1356 = vunpack.c.h.b16 %v1140
    %v1357 = vunpack.c.h.b16 %v1141
    %v1358 = vunpack.c.h.b16 %v1142
    %v1359 = vunpack.c.l.b16 %v1143
    %v1360 = vunpack.c.l.b16 %v1144
    %v1361 = vunpack.c.l.b16 %v1145
    %v1362 = vunpack.c.h.b16 %v1143
    %v1363 = vunpack.c.h.b16 %v1144
    %v1364 = vunpack.c.h.b16 %v1145
    %v1365 = vunpack.c.l.b16 %v1146
    %v1366 = vunpack.c.l.b16 %v1147
    %v1367 = vunpack.c.l.b16 %v1148
    %v1368 = vunpack.c.h.b16 %v1146
    %v1369 = vunpack.c.h.b16 %v1147
    %v1370 = vunpack.c.h.b16 %v1148
    %v1371 = vunpack.c.l.b16 %v1149
    %v1372 = vunpack.c.l.b16 %v1150
    %v1373 = vunpack.c.l.b16 %v1151
    %v1374 = vunpack.c.h.b16 %v1149
    %v1375 = vunpack.c.h.b16 %v1150
    %v1376 = vunpack.c.h.b16 %v1151
    %v1377 = vunpack.c.l.b16 %v1152
    %v1378 = vunpack.c.l.b16 %v1153
    %v1379 = vunpack.c.l.b16 %v1154
    %v1380 = vunpack.c.h.b16 %v1152
    %v1381 = vunpack.c.h.b16 %v1153
    %v1382 = vunpack.c.h.b16 %v1154
    %v1383 = vunpack.c.l.b16 %v1155
    %v1384 = vunpack.c.l.b16 %v1156
    %v1385 = vunpack.c.l.b16 %v1157
    %v1386 = vunpack.c.h.b16 %v1155
    %v1387 = vunpack.c.h.b16 %v1156
    %v1388 = vunpack.c.h.b16 %v1157
    %v1389 = vunpack.c.l.b16 %v1158
    %v1390 = vunpack.c.l.b16 %v1159
    %v1391 = vunpack.c.l.b16 %v1160
    %v1392 = vunpack.c.h.b16 %v1158
    %v1393 = vunpack.c.h.b16 %v1159
    %v1394 = vunpack.c.h.b16 %v1160
    %v1395 = vunpack.c.l.b16 %v1161
    %v1396 = vunpack.c.l.b16 %v1162
    %v1397 = vunpack.c.l.b16 %v1163
    %v1398 = vunpack.c.h.b16 %v1161
    %v1399 = vunpack.c.h.b16 %v1162
    %v1400 = vunpack.c.h.b16 %v1163
    %v1401 = vunpack.c.l.b16 %v1164
    %v1402 = vunpack.c.l.b16 %v1165
    %v1403 = vunpack.c.l.b16 %v1166
    %v1404 = vunpack.c.h.b16 %v1164
    %v1405 = vunpack.c.h.b16 %v1165
    %v1406 = vunpack.c.h.b16 %v1166
    %v1407 = vunpack.c.l.b16 %v1167
    %v1408 = vunpack.c.l.b16 %v1168
    %v1409 = vunpack.c.l.b16 %v1169
    %v1410 = vunpack.c.h.b16 %v1167
    %v1411 = vunpack.c.h.b16 %v1168
    %v1412 = vunpack.c.h.b16 %v1169
    %v1413 = vunpack.c.l.b16 %v1170
    %v1414 = vunpack.c.l.b16 %v1171
    %v1415 = vunpack.c.l.b16 %v1172
    %v1416 = vunpack.c.h.b16 %v1170
    %v1417 = vunpack.c.h.b16 %v1171
    %v1418 = vunpack.c.h.b16 %v1172
    %v1419 = vunpack.c.l.b16 %v1173
    %v1420 = vunpack.c.l.b16 %v1174
    %v1421 = vunpack.c.l.b16 %v1175
    %v1422 = vunpack.c.h.b16 %v1173
    %v1423 = vunpack.c.h.b16 %v1174
    %v1424 = vunpack.c.h.b16 %v1175
    %v1425 = vunpack.c.l.b16 %v1176
    %v1426 = vunpack.c.l.b16 %v1177
    %v1427 = vunpack.c.l.b16 %v1178
    %v1428 = vunpack.c.h.b16 %v1176
    %v1429 = vunpack.c.h.b16 %v1177
    %v1430 = vunpack.c.h.b16 %v1178
    %v1431 = vunpack.c.l.b16 %v1179
    %v1432 = vunpack.c.l.b16 %v1180
    %v1433 = vunpack.c.l.b16 %v1181
    %v1434 = vunpack.c.h.b16 %v1179
    %v1435 = vunpack.c.h.b16 %v1180
    %v1436 = vunpack.c.h.b16 %v1181
    %v1437 = vunpack.c.l.b16 %v1182
    %v1438 = vunpack.c.l.b16 %v1183
    %v1439 = vunpack.c.l.b16 %v1184
    %v1440 = vunpack.c.h.b16 %v1182
    %v1441 = vunpack.c.h.b16 %v1183
    %v1442 = vunpack.c.h.b16 %v1184
    %v1443 = vunpack.c.l.b16 %v1185
    %v1444 = vunpack.c.l.b16 %v1186
    %v1445 = vunpack.c.l.b16 %v1187
    %v1446 = vunpack.c.h.b16 %v1185
    %v1447 = vunpack.c.h.b16 %v1186
    %v1448 = vunpack.c.h.b16 %v1187
    %v1449 = vunpack.c.l.b16 %v1188
    %v1450 = vunpack.c.l.b16 %v1189
    %v1451 = vunpack.c.l.b16 %v1190
    %v1452 = vunpack.c.h.b16 %v1188
    %v1453 = vunpack.c.h.b16 %v1189
    %v1454 = vunpack.c.h.b16 %v1190
    %v1455 = vunpack.c.l.b16 %v1191
    %v1456 = vunpack.c.l.b16 %v1192
    %v1457 = vunpack.c.l.b16 %v1193
    %v1458 = vunpack.c.h.b16 %v1191
    %v1459 = vunpack.c.h.b16 %v1192
    %v1460 = vunpack.c.h.b16 %v1193
    %v1461 = vunpack.c.l.b16 %v1194
    %v1462 = vunpack.c.l.b16 %v1195
    %v1463 = vunpack.c.l.b16 %v1196
    %v1464 = vunpack.c.h.b16 %v1194
    %v1465 = vunpack.c.h.b16 %v1195
    %v1466 = vunpack.c.h.b16 %v1196
    %v1467 = vunpack.c.l.b16 %v1197
    %v1468 = vunpack.c.l.b16 %v1198
    %v1469 = vunpack.c.l.b16 %v1199
    %v1470 = vunpack.c.h.b16 %v1197
    %v1471 = vunpack.c.h.b16 %v1198
    %v1472 = vunpack.c.h.b16 %v1199
    %v1473 = vunpack.c.l.b16 %v1200
    %v1474 = vunpack.c.l.b16 %v1201
    %v1475 = vunpack.c.l.b16 %v1202
    %v1476 = vunpack.c.h.b16 %v1200
    %v1477 = vunpack.c.h.b16 %v1201
    %v1478 = vunpack.c.h.b16 %v1202
    %v1479 = vunpack.c.l.b16 %v1203
    %v1480 = vunpack.c.l.b16 %v1204
    %v1481 = vunpack.c.l.b16 %v1205
    %v1482 = vunpack.c.h.b16 %v1203
    %v1483 = vunpack.c.h.b16 %v1204
    %v1484 = vunpack.c.h.b16 %v1205
    %v1485 = vunpack.c.l.b16 %v1206
    %v1486 = vunpack.c.l.b16 %v1207
    %v1487 = vunpack.c.l.b16 %v1208
    %v1488 = vunpack.c.h.b16 %v1206
    %v1489 = vunpack.c.h.b16 %v1207
    %v1490 = vunpack.c.h.b16 %v1208
    %v1491 = vunpack.c.l.b16 %v1209
    %v1492 = vunpack.c.l.b16 %v1210
    %v1493 = vunpack.c.l.b16 %v1211
    %v1494 = vunpack.c.h.b16 %v1209
    %v1495 = vunpack.c.h.b16 %v1210
    %v1496 = vunpack.c.h.b16 %v1211
    %v1497 = vunpack.c.l.b16 %v1212
    %v1498 = vunpack.c.l.b16 %v1213
    %v1499 = vunpack.c.l.b16 %v1214
    %v1500 = vunpack.c.h.b16 %v1212
    %v1501 = vunpack.c.h.b16 %v1213
    %v1502 = vunpack.c.h.b16 %v1214
    %v1503 = vpack.c.b16 %v1312, %v1311
    %v1504 = vpack.c.b16 %v1313, %v1313
    %v1505 = vpack.c.b16 %v1315, %v1314
    %v1506 = vpack.c.b16 %v1316, %v1316
    %v1507 = vpack.c.b16 %v1318, %v1317
    %v1508 = vpack.c.b16 %v1319, %v1319
    %v1509 = vpack.c.b16 %v1321, %v1320
    %v1510 = vpack.c.b16 %v1322, %v1322
    %v1511 = vpack.c.b16 %v1324, %v1323
    %v1512 = vpack.c.b16 %v1325, %v1325
    %v1513 = vpack.c.b16 %v1327, %v1326
    %v1514 = vpack.c.b16 %v1328, %v1328
    %v1515 = vpack.c.b16 %v1330, %v1329
    %v1516 = vpack.c.b16 %v1331, %v1331
    %v1517 = vpack.c.b16 %v1333, %v1332
    %v1518 = vpack.c.b16 %v1334, %v1334
    %v1519 = vpack.c.b16 %v1336, %v1335
    %v1520 = vpack.c.b16 %v1337, %v1337
    %v1521 = vpack.c.b16 %v1339, %v1338
    %v1522 = vpack.c.b16 %v1340, %v1340
    %v1523 = vpack.c.b16 %v1342, %v1341
    %v1524 = vpack.c.b16 %v1343, %v1343
    %v1525 = vpack.c.b16 %v1345, %v1344
    %v1526 = vpack.c.b16 %v1346, %v1346
    %v1527 = vpack.c.b16 %v1348, %v1347
    %v1528 = vpack.c.b16 %v1349, %v1349
    %v1529 = vpack.c.b16 %v1351, %v1350
    %v1530 = vpack.c.b16 %v1352, %v1352
    %v1531 = vpack.c.b16 %v1354, %v1353
    %v1532 = vpack.c.b16 %v1355, %v1355
    %v1533 = vpack.c.b16 %v1357, %v1356
    %v1534 = vpack.c.b16 %v1358, %v1358
    %v1535 = vpack.c.b16 %v1360, %v1359
    %v1536 = vpack.c.b16 %v1361, %v1361
    %v1537 = vpack.c.b16 %v1363, %v1362
    %v1538 = vpack.c.b16 %v1364, %v1364
    %v1539 = vpack.c.b16 %v1366, %v1365
    %v1540 = vpack.c.b16 %v1367, %v1367
    %v1541 = vpack.c.b16 %v1369, %v1368
    %v1542 = vpack.c.b16 %v1370, %v1370
    %v1543 = vpack.c.b16 %v1372, %v1371
    %v1544 = vpack.c.b16 %v1373, %v1373
    %v1545 = vpack.c.b16 %v1375, %v1374
    %v1546 = vpack.c.b16 %v1376, %v1376
    %v1547 = vpack.c.b16 %v1378, %v1377
    %v1548 = vpack.c.b16 %v1379, %v1379
    %v1549 = vpack.c.b16 %v1381, %v1380
    %v1550 = vpack.c.b16 %v1382, %v1382
    %v1551 = vpack.c.b16 %v1384, %v1383
    %v1552 = vpack.c.b16 %v1385, %v1385
    %v1553 = vpack.c.b16 %v1387, %v1386
    %v1554 = vpack.c.b16 %v1388, %v1388
    %v1555 = vpack.c.b16 %v1390, %v1389
    %v1556 = vpack.c.b16 %v1391, %v1391
    %v1557 = vpack.c.b16 %v1393, %v1392
    %v1558 = vpack.c.b16 %v1394, %v1394
    %v1559 = vpack.c.b16 %v1396, %v1395
    %v1560 = vpack.c.b16 %v1397, %v1397
    %v1561 = vpack.c.b16 %v1399, %v1398
    %v1562 = vpack.c.b16 %v1400, %v1400
    %v1563 = vpack.c.b16 %v1402, %v1401
    %v1564 = vpack.c.b16 %v1403, %v1403
    %v1565 = vpack.c.b16 %v1405, %v1404
    %v1566 = vpack.c.b16 %v1406, %v1406
    %v1567 = vpack.c.b16 %v1408, %v1407
    %v1568 = vpack.c.b16 %v1409, %v1409
    %v1569 = vpack.c.b16 %v1411, %v1410
    %v1570 = vpack.c.b16 %v1412, %v1412
    %v1571 = vpack.c.b16 %v1414, %v1413
    %v1572 = vpack.c.b16 %v1415, %v1415
    %v1573 = vpack.c.b16 %v1417, %v1416
    %v1574 = vpack.c.b16 %v1418, %v1418
    %v1575 = vpack.c.b16 %v1420, %v1419
    %v1576 = vpack.c.b16 %v1421, %v1421
    %v1577 = vpack.c.b16 %v1423, %v1422
    %v1578 = vpack.c.b16 %v1424, %v1424
    %v1579 = vpack.c.b16 %v1426, %v1425
    %v1580 = vpack.c.b16 %v1427, %v1427
    %v1581 = vpack.c.b16 %v1429, %v1428
    %v1582 = vpack.c.b16 %v1430, %v1430
    %v1583 = vpack.c.b16 %v1432, %v1431
    %v1584 = vpack.c.b16 %v1433, %v1433
    %v1585 = vpack.c.b16 %v1435, %v1434
    %v1586 = vpack.c.b16 %v1436, %v1436
    %v1587 = vpack.c.b16 %v1438, %v1437
    %v1588 = vpack.c.b16 %v1439, %v1439
    %v1589 = vpack.c.b16 %v1441, %v1440
    %v1590 = vpack.c.b16 %v1442, %v1442
    %v1591 = vpack.c.b16 %v1444, %v1443
    %v1592 = vpack.c.b16 %v1445, %v1445
    %v1593 = vpack.c.b16 %v1447, %v1446
    %v1594 = vpack.c.b16 %v1448, %v1448
    %v1595 = vpack.c.b16 %v1450, %v1449
    %v1596 = vpack.c.b16 %v1451, %v1451
    %v1597 = vpack.c.b16 %v1453, %v1452
    %v1598 = vpack.c.b16 %v1454, %v1454
    %v1599 = vpack.c.b16 %v1456, %v1455
    %v1600 = vpack.c.b16 %v1457, %v1457
    %v1601 = vpack.c.b16 %v1459, %v1458
    %v1602 = vpack.c.b16 %v1460, %v1460
    %v1603 = vpack.c.b16 %v1462, %v1461
    %v1604 = vpack.c.b16 %v1463, %v1463
    %v1605 = vpack.c.b16 %v1465, %v1464
    %v1606 = vpack.c.b16 %v1466, %v1466
    %v1607 = vpack.c.b16 %v1468, %v1467
    %v1608 = vpack.c.b16 %v1469, %v1469
    %v1609 = vpack.c.b16 %v1471, %v1470
    %v1610 = vpack.c.b16 %v1472, %v1472
    %v1611 = vpack.c.b16 %v1474, %v1473
    %v1612 = vpack.c.b16 %v1475, %v1475
    %v1613 = vpack.c.b16 %v1477, %v1476
    %v1614 = vpack.c.b16 %v1478, %v1478
    %v1615 = vpack.c.b16 %v1480, %v1479
    %v1616 = vpack.c.b16 %v1481, %v1481
    %v1617 = vpack.c.b16 %v1483, %v1482
    %v1618 = vpack.c.b16 %v1484, %v1484
    %v1619 = vpack.c.b16 %v1486, %v1485
    %v1620 = vpack.c.b16 %v1487, %v1487
    %v1621 = vpack.c.b16 %v1489, %v1488
    %v1622 = vpack.c.b16 %v1490, %v1490
    %v1623 = vpack.c.b16 %v1492, %v1491
    %v1624 = vpack.c.b16 %v1493, %v1493
    %v1625 = vpack.c.b16 %v1495, %v1494
    %v1626 = vpack.c.b16 %v1496, %v1496
    %v1627 = vpack.c.b16 %v1498, %v1497
    %v1628 = vpack.c.b16 %v1499, %v1499
    %v1629 = vpack.c.b16 %v1501, %v1500
    %v1630 = vpack.c.b16 %v1502, %v1502
    %1759 = vst [vmem:[#allocation7] sm:$0xff] %v1503
    %1760 = vst [vmem:[#allocation7 + $0x8] sm:$0xf] %v1504
    %1761 = vst [vmem:[#allocation7 + $0xc] sm:$0xff] %v1505
    %1762 = vst [vmem:[#allocation7 + $0x14] sm:$0xf] %v1506
    %1763 = vst [vmem:[#allocation7 + $0x18] sm:$0xff] %v1507
    %1764 = vst [vmem:[#allocation7 + $0x20] sm:$0xf] %v1508
    %1765 = vst [vmem:[#allocation7 + $0x24] sm:$0xff] %v1509
    %1766 = vst [vmem:[#allocation7 + $0x2c] sm:$0xf] %v1510
    %1767 = vst [vmem:[#allocation7 + $0x30] sm:$0xff] %v1511
    %1768 = vst [vmem:[#allocation7 + $0x38] sm:$0xf] %v1512
    %1769 = vst [vmem:[#allocation7 + $0x3c] sm:$0xff] %v1513
    %1770 = vst [vmem:[#allocation7 + $0x44] sm:$0xf] %v1514
    %1771 = vst [vmem:[#allocation7 + $0x48] sm:$0xff] %v1515
    %1772 = vst [vmem:[#allocation7 + $0x50] sm:$0xf] %v1516
    %1773 = vst [vmem:[#allocation7 + $0x54] sm:$0xff] %v1517
    %1774 = vst [vmem:[#allocation7 + $0x5c] sm:$0xf] %v1518
    %1775 = vst [vmem:[#allocation7 + $0x60] sm:$0xff] %v1519
    %1776 = vst [vmem:[#allocation7 + $0x68] sm:$0xf] %v1520
    %1777 = vst [vmem:[#allocation7 + $0x6c] sm:$0xff] %v1521
    %1778 = vst [vmem:[#allocation7 + $0x74] sm:$0xf] %v1522
    %1779 = vst [vmem:[#allocation7 + $0x78] sm:$0xff] %v1523
    %1780 = vst [vmem:[#allocation7 + $0x80] sm:$0xf] %v1524
    %1781 = vst [vmem:[#allocation7 + $0x84] sm:$0xff] %v1525
    %1782 = vst [vmem:[#allocation7 + $0x8c] sm:$0xf] %v1526
    %1783 = vst [vmem:[#allocation7 + $0x90] sm:$0xff] %v1527
    %1784 = vst [vmem:[#allocation7 + $0x98] sm:$0xf] %v1528
    %1785 = vst [vmem:[#allocation7 + $0x9c] sm:$0xff] %v1529
    %1786 = vst [vmem:[#allocation7 + $0xa4] sm:$0xf] %v1530
    %1787 = vst [vmem:[#allocation7 + $0xa8] sm:$0xff] %v1531
    %1788 = vst [vmem:[#allocation7 + $0xb0] sm:$0xf] %v1532
    %1789 = vst [vmem:[#allocation7 + $0xb4] sm:$0xff] %v1533
    %1790 = vst [vmem:[#allocation7 + $0xbc] sm:$0xf] %v1534
    %1791 = vst [vmem:[#allocation7 + $0xc0] sm:$0xff] %v1535
    %1792 = vst [vmem:[#allocation7 + $0xc8] sm:$0xf] %v1536
    %1793 = vst [vmem:[#allocation7 + $0xcc] sm:$0xff] %v1537
    %1794 = vst [vmem:[#allocation7 + $0xd4] sm:$0xf] %v1538
    %1795 = vst [vmem:[#allocation7 + $0xd8] sm:$0xff] %v1539
    %1796 = vst [vmem:[#allocation7 + $0xe0] sm:$0xf] %v1540
    %1797 = vst [vmem:[#allocation7 + $0xe4] sm:$0xff] %v1541
    %1798 = vst [vmem:[#allocation7 + $0xec] sm:$0xf] %v1542
    %1799 = vst [vmem:[#allocation7 + $0xf0] sm:$0xff] %v1543
    %1800 = vst [vmem:[#allocation7 + $0xf8] sm:$0xf] %v1544
    %1801 = vst [vmem:[#allocation7 + $0xfc] sm:$0xff] %v1545
    %1802 = vst [vmem:[#allocation7 + $0x104] sm:$0xf] %v1546
    %1803 = vst [vmem:[#allocation7 + $0x108] sm:$0xff] %v1547
    %1804 = vst [vmem:[#allocation7 + $0x110] sm:$0xf] %v1548
    %1805 = vst [vmem:[#allocation7 + $0x114] sm:$0xff] %v1549
    %1806 = vst [vmem:[#allocation7 + $0x11c] sm:$0xf] %v1550
    %1807 = vst [vmem:[#allocation7 + $0x120] sm:$0xff] %v1551
    %1808 = vst [vmem:[#allocation7 + $0x128] sm:$0xf] %v1552
    %1809 = vst [vmem:[#allocation7 + $0x12c] sm:$0xff] %v1553
    %1810 = vst [vmem:[#allocation7 + $0x134] sm:$0xf] %v1554
    %1811 = vst [vmem:[#allocation7 + $0x138] sm:$0xff] %v1555
    %1812 = vst [vmem:[#allocation7 + $0x140] sm:$0xf] %v1556
    %1813 = vst [vmem:[#allocation7 + $0x144] sm:$0xff] %v1557
    %1814 = vst [vmem:[#allocation7 + $0x14c] sm:$0xf] %v1558
    %1815 = vst [vmem:[#allocation7 + $0x150] sm:$0xff] %v1559
    %1816 = vst [vmem:[#allocation7 + $0x158] sm:$0xf] %v1560
    %1817 = vst [vmem:[#allocation7 + $0x15c] sm:$0xff] %v1561
    %1818 = vst [vmem:[#allocation7 + $0x164] sm:$0xf] %v1562
    %1819 = vst [vmem:[#allocation7 + $0x168] sm:$0xff] %v1563
    %1820 = vst [vmem:[#allocation7 + $0x170] sm:$0xf] %v1564
    %1821 = vst [vmem:[#allocation7 + $0x174] sm:$0xff] %v1565
    %1822 = vst [vmem:[#allocation7 + $0x17c] sm:$0xf] %v1566
    %1823 = vst [vmem:[#allocation7 + $0x180] sm:$0xff] %v1567
    %1824 = vst [vmem:[#allocation7 + $0x188] sm:$0xf] %v1568
    %1825 = vst [vmem:[#allocation7 + $0x18c] sm:$0xff] %v1569
    %1826 = vst [vmem:[#allocation7 + $0x194] sm:$0xf] %v1570
    %1827 = vst [vmem:[#allocation7 + $0x198] sm:$0xff] %v1571
    %1828 = vst [vmem:[#allocation7 + $0x1a0] sm:$0xf] %v1572
    %1829 = vst [vmem:[#allocation7 + $0x1a4] sm:$0xff] %v1573
    %1830 = vst [vmem:[#allocation7 + $0x1ac] sm:$0xf] %v1574
    %1831 = vst [vmem:[#allocation7 + $0x1b0] sm:$0xff] %v1575
    %1832 = vst [vmem:[#allocation7 + $0x1b8] sm:$0xf] %v1576
    %1833 = vst [vmem:[#allocation7 + $0x1bc] sm:$0xff] %v1577
    %1834 = vst [vmem:[#allocation7 + $0x1c4] sm:$0xf] %v1578
    %1835 = vst [vmem:[#allocation7 + $0x1c8] sm:$0xff] %v1579
    %1836 = vst [vmem:[#allocation7 + $0x1d0] sm:$0xf] %v1580
    %1837 = vst [vmem:[#allocation7 + $0x1d4] sm:$0xff] %v1581
    %1838 = vst [vmem:[#allocation7 + $0x1dc] sm:$0xf] %v1582
    %1839 = vst [vmem:[#allocation7 + $0x1e0] sm:$0xff] %v1583
    %1840 = vst [vmem:[#allocation7 + $0x1e8] sm:$0xf] %v1584
    %1841 = vst [vmem:[#allocation7 + $0x1ec] sm:$0xff] %v1585
    %1842 = vst [vmem:[#allocation7 + $0x1f4] sm:$0xf] %v1586
    %1843 = vst [vmem:[#allocation7 + $0x1f8] sm:$0xff] %v1587
    %1844 = vst [vmem:[#allocation7 + $0x200] sm:$0xf] %v1588
    %1845 = vst [vmem:[#allocation7 + $0x204] sm:$0xff] %v1589
    %1846 = vst [vmem:[#allocation7 + $0x20c] sm:$0xf] %v1590
    %1847 = vst [vmem:[#allocation7 + $0x210] sm:$0xff] %v1591
    %1848 = vst [vmem:[#allocation7 + $0x218] sm:$0xf] %v1592
    %1849 = vst [vmem:[#allocation7 + $0x21c] sm:$0xff] %v1593
    %1850 = vst [vmem:[#allocation7 + $0x224] sm:$0xf] %v1594
    %1851 = vst [vmem:[#allocation7 + $0x228] sm:$0xff] %v1595
    %1852 = vst [vmem:[#allocation7 + $0x230] sm:$0xf] %v1596
    %1853 = vst [vmem:[#allocation7 + $0x234] sm:$0xff] %v1597
    %1854 = vst [vmem:[#allocation7 + $0x23c] sm:$0xf] %v1598
    %1855 = vst [vmem:[#allocation7 + $0x240] sm:$0xff] %v1599
    %1856 = vst [vmem:[#allocation7 + $0x248] sm:$0xf] %v1600
    %1857 = vst [vmem:[#allocation7 + $0x24c] sm:$0xff] %v1601
    %1858 = vst [vmem:[#allocation7 + $0x254] sm:$0xf] %v1602
    %1859 = vst [vmem:[#allocation7 + $0x258] sm:$0xff] %v1603
    %1860 = vst [vmem:[#allocation7 + $0x260] sm:$0xf] %v1604
    %1861 = vst [vmem:[#allocation7 + $0x264] sm:$0xff] %v1605
    %1862 = vst [vmem:[#allocation7 + $0x26c] sm:$0xf] %v1606
    %1863 = vst [vmem:[#allocation7 + $0x270] sm:$0xff] %v1607
    %1864 = vst [vmem:[#allocation7 + $0x278] sm:$0xf] %v1608
    %1865 = vst [vmem:[#allocation7 + $0x27c] sm:$0xff] %v1609
    %1866 = vst [vmem:[#allocation7 + $0x284] sm:$0xf] %v1610
    %1867 = vst [vmem:[#allocation7 + $0x288] sm:$0xff] %v1611
    %1868 = vst [vmem:[#allocation7 + $0x290] sm:$0xf] %v1612
    %1869 = vst [vmem:[#allocation7 + $0x294] sm:$0xff] %v1613
    %1870 = vst [vmem:[#allocation7 + $0x29c] sm:$0xf] %v1614
    %1871 = vst [vmem:[#allocation7 + $0x2a0] sm:$0xff] %v1615
    %1872 = vst [vmem:[#allocation7 + $0x2a8] sm:$0xf] %v1616
    %1873 = vst [vmem:[#allocation7 + $0x2ac] sm:$0xff] %v1617
    %1874 = vst [vmem:[#allocation7 + $0x2b4] sm:$0xf] %v1618
    %1875 = vst [vmem:[#allocation7 + $0x2b8] sm:$0xff] %v1619
    %1876 = vst [vmem:[#allocation7 + $0x2c0] sm:$0xf] %v1620
    %1877 = vst [vmem:[#allocation7 + $0x2c4] sm:$0xff] %v1621
    %1878 = vst [vmem:[#allocation7 + $0x2cc] sm:$0xf] %v1622
    %1879 = vst [vmem:[#allocation7 + $0x2d0] sm:$0xff] %v1623
    %1880 = vst [vmem:[#allocation7 + $0x2d8] sm:$0xf] %v1624
    %1881 = vst [vmem:[#allocation7 + $0x2dc] sm:$0xff] %v1625
    %1882 = vst [vmem:[#allocation7 + $0x2e4] sm:$0xf] %v1626
    %1883 = vst [vmem:[#allocation7 + $0x2e8] sm:$0xff] %v1627
    %1884 = vst [vmem:[#allocation7 + $0x2f0] sm:$0xf] %v1628
    %1885 = vst [vmem:[#allocation7 + $0x2f4] sm:$0xff] %v1629
    %1886 = vst [vmem:[#allocation7 + $0x2fc] sm:$0xf] %v1630
    // Predicated region
    $region22: #{tpu_custom_call.1} parent=1 // pred_check
      _
    $region23: #{tpu_custom_call.1} parent=1 // pred_check_branch
      %1888 = sbr.rel (0) target = $region25
    $region24: #{tpu_custom_call.1} parent=1 // pred_region
      %s1890 = ssub.s32 12288, 12288
      %1891 = vsyncadd [#allocation4], %s1890
      %s1892 = sshll.u32 [#allocation7], 4
      %s1893 = int_to_ptr.vmem [resolvable:$true] %s1892
      %1898 = dma.vmem_to_hbm [thread:$0]  %s1893, 12288, %s3, [#allocation4], 192, 192, 12
    $region25: #{tpu_custom_call.1} parent=1 // pred_fallthru
      _
    // Predicated region
    $region26: #{tpu_custom_call.1} parent=1 // pred_check
      _
    $region27: #{tpu_custom_call.1} parent=1 // pred_check_branch
      %1900 = sbr.rel (0) target = $region29
    $region28: #{tpu_custom_call.1} parent=1 // pred_region
      %1901 = dma.done [#allocation4], 12288
    $region29: #{tpu_custom_call.1} parent=1 // pred_fallthru
      _
    %1902 = vsyncpa [#allocation3], 1
    %1903 = vsyncpa [#allocation6], 1
    %1904 = vsyncpa [#allocation4], 1

</llo_original>
